<compile_context>
chip_gen: v7x
topology: tpu7x:2x2x1
jax: 0.10.0
libtpu: 0.0.40
codegen_flags: <defaults>
</compile_context>

<pallas_src>
import functools

import jax
import jax.numpy as jnp
from jax import lax
from jax.experimental import pallas as pl
from jax.experimental.pallas import tpu as pltpu

BN_EPS = 1e-5  # PyTorch BatchNorm2d default eps


def _coupling_kernel(reverse, C, H, W,
                     x_ref, mask_ref,
                     a1_ref, b1_ref, w1_ref, b2_ref, w2_ref, b3_ref,
                     w3_ref, bias3_ref, scale_ref, tmask_ref,
                     x_out_ref, ssum_ref,
                     stack1_ref, stack3_ref):
    HW = H * W
    C2 = 2 * C

    def im2col(h_act, stack_ref, cp):
        # Write the 9 spatially shifted / boundary-masked copies of h_act into
        # the stack at tile-aligned sublane offsets; one matmul then performs
        # the whole 3x3 convolution.  Rolls are per-sample (mod HW); the
        # precomputed masks zero every tap that crosses an image boundary.
        for kh in range(3):
            for kw in range(3):
                dh, dw = kh - 1, kw - 1
                off = dh * W + dw
                tap = kh * 3 + kw
                if off == 0:
                    piece = h_act
                else:
                    piece = pltpu.roll(h_act, shift=(-off) % HW, axis=1)
                    mi = tap if tap < 4 else tap - 1          # skip center tap
                    piece = piece * mask_ref[mi:mi + 1, :]
                stack_ref[tap * cp:(tap + 1) * cp, :] = piece.astype(
                    stack_ref.dtype)

    x = x_ref[...]                                              # (2C, HW) f32

    # in_norm (folded eval-mode BN) + ReLU.  Rows [:C] (x_change) have a=b=0,
    # so they become exact zeros and contribute nothing to the convolution.
    h = jnp.maximum(x * a1_ref[...] + b1_ref[...], 0.0)         # (2C, HW)

    # in_conv 3x3 (mid_norm scale pre-folded into w1) + mid_norm bias + ReLU.
    im2col(h, stack1_ref, C2)
    h = jnp.dot(w1_ref[...], stack1_ref[...],
                preferred_element_type=jnp.float32)             # (M, HW)
    h = jnp.maximum(h + b2_ref[...], 0.0)

    # mid_conv 1x1 (out_norm scale pre-folded into w2, bf16 MXU operands).
    h = jnp.dot(w2_ref[...], h.astype(w2_ref.dtype),
                preferred_element_type=jnp.float32)             # (M, HW)
    h = jnp.maximum(h + b3_ref[...], 0.0)

    # out_conv 3x3 + bias (bf16 stack/weights, f32 accumulation).
    # Output rows pre-permuted host-side: [0:C] = s_pre, [C:2C] = t.
    im2col(h, stack3_ref, w2_ref.shape[0])
    st = jnp.dot(w3_ref[...], stack3_ref[...],
                 preferred_element_type=jnp.float32) + bias3_ref[...]  # (2C,HW)

    # Full-tile coupling math: scale rows [C:] are 0 -> s_full rows [C:] = 0
    # (exp(+-s_full) = 1 there); t is sublane-rolled under x_change and masked
    # so t_full rows [C:] = 0.  Hence rows [C:] of the output reproduce x_id
    # exactly while rows [:C] get the affine coupling transform.
    s_full = scale_ref[...] * jnp.tanh(st)                      # (2C, HW)
    t_full = pltpu.roll(st, shift=C, axis=0) * tmask_ref[...]   # (2C, HW)
    if reverse:
        x_out_ref[...] = x * jnp.exp(-s_full) - t_full
    else:
        x_out_ref[...] = (x + t_full) * jnp.exp(s_full)

    # Per-sample sum of s, lane-padded to a full (1, 128) block (parallel-safe
    # per-step output); the ldj +/- add is applied host-side.
    ssum_ref[...] = jnp.broadcast_to(jnp.sum(s_full), (1, 128))


def make_coupling_params(key, in_channels, mid_channels):
    """Deterministic synthetic parameters (shapes follow the PyTorch __init__).

    NOTE: out_conv is zero-initialized in the original module; here it gets
    small random values so the kernel path is exercised non-trivially.
    BatchNorm running stats are also given non-trivial synthetic values.
    """
    C, M = in_channels, mid_channels
    ks = jax.random.split(key, 12)
    w_in = 0.05 * jax.random.normal(ks[0], (M, C, 3, 3), jnp.float32)
    w_mid = 0.05 * jax.random.normal(ks[1], (M, M, 1, 1), jnp.float32)
    w_out = 0.05 * jax.random.normal(ks[2], (2 * C, M, 3, 3), jnp.float32)
    b_out = 0.05 * jax.random.normal(ks[3], (2 * C,), jnp.float32)

    def bn(kg, kb, km, kv, n):
        gamma = 1.0 + 0.1 * jax.random.normal(kg, (n,), jnp.float32)
        beta = 0.1 * jax.random.normal(kb, (n,), jnp.float32)
        rm = 0.1 * jax.random.normal(km, (n,), jnp.float32)
        rv = 1.0 + 0.1 * jax.random.uniform(kv, (n,), jnp.float32)
        return gamma, beta, rm, rv

    bn1 = bn(ks[4], ks[5], ks[6], ks[7], C)
    bn2 = bn(ks[8], ks[9], ks[10], ks[11], M)
    k2 = jax.random.split(jax.random.fold_in(key, 1), 4)
    bn3 = bn(k2[0], k2[1], k2[2], k2[3], M)
    scale = jnp.ones((C, 1, 1), jnp.float32)  # as in the module __init__
    return dict(w_in=w_in, w_mid=w_mid, w_out=w_out, b_out=b_out,
                bn1=bn1, bn2=bn2, bn3=bn3, scale=scale)


@functools.partial(jax.jit, static_argnames=("reverse",))
def coupling_forward(x, ldj, params, reverse=False):
    """x: NCHW float32 [N, 2*C, H, W]; ldj: [N] float32."""
    N, C2, H, W = x.shape
    C = C2 // 2
    M = params["w_mid"].shape[0]
    HW = H * W

    x2 = x.reshape(N, C2, HW)  # free: channels on sublanes, spatial on lanes

    # Fold eval-mode BatchNorm into per-channel affine y = x * a + b.
    # TODO(synk): training-mode BN (batch stats) / ActNorm data-dependent init
    # are not implemented; this is the inference path.
    def fold_bn(gamma, beta, rm, rv):
        a = gamma / jnp.sqrt(rv + BN_EPS)
        return a, beta - rm * a

    a1, b1 = fold_bn(*params["bn1"])
    a2, b2 = fold_bn(*params["bn2"])
    a3, b3 = fold_bn(*params["bn3"])

    zC = jnp.zeros((C,), jnp.float32)
    a1f = jnp.concatenate([zC, a1]).reshape(C2, 1)   # rows [:C] (x_change) -> 0
    b1f = jnp.concatenate([zC, b1]).reshape(C2, 1)

    # in_conv: tap-major over the full 2C x-channels (x_change columns zero),
    # mid_norm scale a2 folded into the output rows.  Kept f32 so the im2col
    # stack stores stay 8-row tile-aligned.
    w1 = jnp.transpose(params["w_in"], (0, 2, 3, 1)).reshape(M, 9, C)
    w1 = jnp.pad(w1, ((0, 0), (0, 0), (C, 0)))                   # (M, 9, 2C)
    w1 = (a2[:, None, None] * w1).reshape(M, 9 * C2)
    b2c = b2.reshape(M, 1)

    # mid_conv 1x1 with out_norm scale a3 folded in; bf16 MXU operand.
    w2 = (a3[:, None] * params["w_mid"][:, :, 0, 0]).astype(jnp.bfloat16)
    b3c = b3.reshape(M, 1)

    # out_conv: outputs permuted so rows [0:C] = s channels, [C:2C] = t.
    perm = jnp.concatenate([jnp.arange(0, C2, 2), jnp.arange(1, C2, 2)])
    w3 = jnp.transpose(params["w_out"][perm], (0, 2, 3, 1)) \
            .reshape(C2, 9 * M).astype(jnp.bfloat16)
    bias3 = params["b_out"][perm].reshape(C2, 1)

    scale8 = jnp.concatenate([params["scale"].reshape(C), zC]).reshape(C2, 1)
    tmask = jnp.concatenate([jnp.ones((C,), jnp.float32), zC]).reshape(C2, 1)

    # Boundary masks for the 8 non-center 3x3 taps (shared by every sample).
    pos = jnp.arange(HW, dtype=jnp.int32)
    r, c = pos // W, pos % W
    rows = []
    for kh in range(3):
        for kw in range(3):
            dh, dw = kh - 1, kw - 1
            if dh == 0 and dw == 0:
                continue
            rows.append(((r + dh >= 0) & (r + dh < H) &
                         (c + dw >= 0) & (c + dw < W)).astype(jnp.float32))
    masks = jnp.stack(rows)                                      # (8, HW)

    kernel = functools.partial(_coupling_kernel, bool(reverse), C, H, W)

    def const_spec(shape):
        nd = len(shape)
        return pl.BlockSpec(shape, lambda n: (0,) * nd)

    x_in_spec = pl.BlockSpec((None, C2, HW), lambda n: (n, 0, 0))
    x_out_spec = pl.BlockSpec((None, C2, HW), lambda n: (n, 0, 0))
    ssum_spec = pl.BlockSpec((None, 1, 128), lambda n: (n, 0, 0))

    x_out, ssum = pl.pallas_call(
        kernel,
        grid=(N,),  # one sample per step; "parallel" -> both v7x TCs used
        in_specs=[x_in_spec, const_spec((8, HW)),
                  const_spec((C2, 1)), const_spec((C2, 1)),
                  const_spec((M, 9 * C2)), const_spec((M, 1)),
                  const_spec((M, M)), const_spec((M, 1)),
                  const_spec((C2, 9 * M)), const_spec((C2, 1)),
                  const_spec((C2, 1)), const_spec((C2, 1))],
        out_specs=(x_out_spec, ssum_spec),
        out_shape=(jax.ShapeDtypeStruct((N, C2, HW), jnp.float32),
                   jax.ShapeDtypeStruct((N, 1, 128), jnp.float32)),
        scratch_shapes=[pltpu.VMEM((9 * C2, HW), jnp.float32),
                        pltpu.VMEM((9 * M, HW), jnp.bfloat16)],
        input_output_aliases={0: 0},  # write the change-half back in place
        compiler_params=pltpu.CompilerParams(
            dimension_semantics=("parallel",)),
    )(x2, masks, a1f, b1f, w1, b2c, w2, b3c, w3, bias3, scale8, tmask)

    s_sum = ssum[:, 0, 0]
    ldj_out = ldj - s_sum if reverse else ldj + s_sum
    return x_out.reshape(N, C2, H, W), ldj_out


def coupling_reference(x, ldj, params, reverse=False):
    """Pure-JAX reference mirroring the PyTorch forward (eval-mode BN)."""
    N, C2, H, W = x.shape
    C = C2 // 2
    x_change, x_id = x[:, :C], x[:, C:]

    def bn(h, p):
        gamma, beta, rm, rv = p
        inv = 1.0 / jnp.sqrt(rv + BN_EPS)
        return (h - rm[None, :, None, None]) * inv[None, :, None, None] \
            * gamma[None, :, None, None] + beta[None, :, None, None]

    dn = ("NCHW", "OIHW", "NCHW")
    h = jax.nn.relu(bn(x_id, params["bn1"]))
    h = lax.conv_general_dilated(h, params["w_in"], (1, 1), "SAME",
                                 dimension_numbers=dn)
    h = jax.nn.relu(bn(h, params["bn2"]))
    h = lax.conv_general_dilated(h, params["w_mid"], (1, 1), "SAME",
                                 dimension_numbers=dn)
    h = jax.nn.relu(bn(h, params["bn3"]))
    st = lax.conv_general_dilated(h, params["w_out"], (1, 1), "SAME",
                                  dimension_numbers=dn)
    st = st + params["b_out"][None, :, None, None]
    s, t = st[:, 0::2], st[:, 1::2]
    s = params["scale"][None] * jnp.tanh(s)
    if reverse:
        x_change = x_change * jnp.exp(-s) - t
        ldj = ldj - s.reshape(N, -1).sum(-1)
    else:
        x_change = (x_change + t) * jnp.exp(s)
        ldj = ldj + s.reshape(N, -1).sum(-1)
    return jnp.concatenate([x_change, x_id], axis=1), ldj


if __name__ == "__main__":
    key = jax.random.PRNGKey(0)
    kx, kl, kp = jax.random.split(key, 3)

    in_channels, mid_channels = 4, 32
    N, H, W = 2, 16, 16

    x = jax.random.normal(kx, (N, 2 * in_channels, H, W), jnp.float32)
    ldj = jax.random.normal(kl, (N,), jnp.float32)
    params = make_coupling_params(kp, in_channels, mid_channels)

    for reverse in (False, True):
        out_x, out_ldj = coupling_forward(x, ldj, params, reverse=reverse)
        jax.block_until_ready((out_x, out_ldj))

        ref_x, ref_ldj = coupling_reference(x, ldj, params, reverse=reverse)
        assert out_x.shape == x.shape and out_ldj.shape == ldj.shape
        # Tolerances account for bf16 MXU operands (f32 accumulation).
        assert jnp.allclose(out_x, ref_x, atol=1e-2, rtol=5e-3), \
            f"x mismatch (reverse={reverse})"
        assert jnp.allclose(out_ldj, ref_ldj, atol=5e-2, rtol=5e-3), \
            f"ldj mismatch (reverse={reverse})"

    print("KERNEL_OK")
</pallas_src>

<mosaic_0001>
module attributes {stable_mosaic.version = 11 : i64} {
  func.func @_coupling_kernel(%arg0: i32, %arg1: memref<1x8x256xf32, #tpu.memory_space<vmem>>, %arg2: memref<8x256xf32, #tpu.memory_space<vmem>>, %arg3: memref<8x1xf32, #tpu.memory_space<vmem>>, %arg4: memref<8x1xf32, #tpu.memory_space<vmem>>, %arg5: memref<32x72xf32, #tpu.memory_space<vmem>>, %arg6: memref<32x1xf32, #tpu.memory_space<vmem>>, %arg7: memref<32x32xbf16, #tpu.memory_space<vmem>>, %arg8: memref<32x1xf32, #tpu.memory_space<vmem>>, %arg9: memref<8x288xbf16, #tpu.memory_space<vmem>>, %arg10: memref<8x1xf32, #tpu.memory_space<vmem>>, %arg11: memref<8x1xf32, #tpu.memory_space<vmem>>, %arg12: memref<8x1xf32, #tpu.memory_space<vmem>>, %arg13: memref<1x8x256xf32, #tpu.memory_space<vmem>>, %arg14: memref<1x1x128xf32, #tpu.memory_space<vmem>>, %arg15: memref<72x256xf32, #tpu.memory_space<vmem>>, %arg16: memref<288x256xbf16, #tpu.memory_space<vmem>>) attributes {dimension_semantics = [#tpu.dimension_semantics<parallel>], iteration_bounds = array<i64: 2>, scalar_prefetch = 0 : i64, scratch_operands = 2 : i64, tpu.core_type = #tpu.core_type<tc>, window_params = [{transform_indices = @transform_0, window_bounds = array<i64: 1, 8, 256>}, {pipeline_mode = #tpu.pipeline_mode<synchronous>, transform_indices = @transform_1, window_bounds = array<i64: 8, 256>}, {pipeline_mode = #tpu.pipeline_mode<synchronous>, transform_indices = @transform_2, window_bounds = array<i64: 8, 1>}, {pipeline_mode = #tpu.pipeline_mode<synchronous>, transform_indices = @transform_3, window_bounds = array<i64: 8, 1>}, {pipeline_mode = #tpu.pipeline_mode<synchronous>, transform_indices = @transform_4, window_bounds = array<i64: 32, 72>}, {pipeline_mode = #tpu.pipeline_mode<synchronous>, transform_indices = @transform_5, window_bounds = array<i64: 32, 1>}, {pipeline_mode = #tpu.pipeline_mode<synchronous>, transform_indices = @transform_6, window_bounds = array<i64: 32, 32>}, {pipeline_mode = #tpu.pipeline_mode<synchronous>, transform_indices = @transform_7, window_bounds = array<i64: 32, 1>}, {pipeline_mode = #tpu.pipeline_mode<synchronous>, transform_indices = @transform_8, window_bounds = array<i64: 8, 288>}, {pipeline_mode = #tpu.pipeline_mode<synchronous>, transform_indices = @transform_9, window_bounds = array<i64: 8, 1>}, {pipeline_mode = #tpu.pipeline_mode<synchronous>, transform_indices = @transform_10, window_bounds = array<i64: 8, 1>}, {pipeline_mode = #tpu.pipeline_mode<synchronous>, transform_indices = @transform_11, window_bounds = array<i64: 8, 1>}, {transform_indices = @transform_12, window_bounds = array<i64: 1, 8, 256>}, {transform_indices = @transform_13, window_bounds = array<i64: 1, 1, 128>}]} {
    %c0 = arith.constant 0 : index
    %c0_0 = arith.constant 0 : index
    %c0_1 = arith.constant 0 : index
    %0 = vector.load %arg1[%c0, %c0_0, %c0_1] : memref<1x8x256xf32, #tpu.memory_space<vmem>>, vector<1x8x256xf32>
    %1 = vector.shape_cast %0 : vector<1x8x256xf32> to vector<8x256xf32>
    %c0_2 = arith.constant 0 : index
    %c0_3 = arith.constant 0 : index
    %2 = vector.load %arg3[%c0_2, %c0_3] : memref<8x1xf32, #tpu.memory_space<vmem>>, vector<8x1xf32>
    %3 = vector.broadcast %2 : vector<8x1xf32> to vector<8x256xf32>
    %4 = arith.mulf %1, %3 : vector<8x256xf32>
    %c0_4 = arith.constant 0 : index
    %c0_5 = arith.constant 0 : index
    %5 = vector.load %arg4[%c0_4, %c0_5] : memref<8x1xf32, #tpu.memory_space<vmem>>, vector<8x1xf32>
    %6 = vector.broadcast %5 : vector<8x1xf32> to vector<8x256xf32>
    %7 = arith.addf %4, %6 : vector<8x256xf32>
    %cst = arith.constant 0.000000e+00 : f32
    %8 = vector.broadcast %cst : f32 to vector<8x256xf32>
    %9 = arith.maximumf %7, %8 : vector<8x256xf32>
    %c17_i32 = arith.constant 17 : i32
    %10 = tpu.dynamic_rotate %9 by %c17_i32 dim 1 : vector<8x256xf32>, i32 -> vector<8x256xf32>
    %c0_6 = arith.constant 0 : index
    %c0_7 = arith.constant 0 : index
    %11 = vector.load %arg2[%c0_6, %c0_7] : memref<8x256xf32, #tpu.memory_space<vmem>>, vector<1x256xf32>
    %12 = vector.broadcast %11 : vector<1x256xf32> to vector<8x256xf32>
    %13 = arith.mulf %10, %12 : vector<8x256xf32>
    %c0_8 = arith.constant 0 : index
    %c0_9 = arith.constant 0 : index
    %14 = vector.load %arg15[%c0_8, %c0_9] : memref<72x256xf32, #tpu.memory_space<vmem>>, vector<8x256xf32>
    tpu.vector_store %arg15[%c0_8, %c0_9], %13 {strides = array<i32>} : memref<72x256xf32, #tpu.memory_space<vmem>>, vector<8x256xf32>,
    %c16_i32 = arith.constant 16 : i32
    %15 = tpu.dynamic_rotate %9 by %c16_i32 dim 1 : vector<8x256xf32>, i32 -> vector<8x256xf32>
    %c1 = arith.constant 1 : index
    %c0_10 = arith.constant 0 : index
    %16 = vector.load %arg2[%c1, %c0_10] : memref<8x256xf32, #tpu.memory_space<vmem>>, vector<1x256xf32>
    %17 = vector.broadcast %16 : vector<1x256xf32> to vector<8x256xf32>
    %18 = arith.mulf %15, %17 : vector<8x256xf32>
    %c8 = arith.constant 8 : index
    %c0_11 = arith.constant 0 : index
    %19 = vector.load %arg15[%c8, %c0_11] : memref<72x256xf32, #tpu.memory_space<vmem>>, vector<8x256xf32>
    tpu.vector_store %arg15[%c8, %c0_11], %18 {strides = array<i32>} : memref<72x256xf32, #tpu.memory_space<vmem>>, vector<8x256xf32>,
    %c15_i32 = arith.constant 15 : i32
    %20 = tpu.dynamic_rotate %9 by %c15_i32 dim 1 : vector<8x256xf32>, i32 -> vector<8x256xf32>
    %c2 = arith.constant 2 : index
    %c0_12 = arith.constant 0 : index
    %21 = vector.load %arg2[%c2, %c0_12] : memref<8x256xf32, #tpu.memory_space<vmem>>, vector<1x256xf32>
    %22 = vector.broadcast %21 : vector<1x256xf32> to vector<8x256xf32>
    %23 = arith.mulf %20, %22 : vector<8x256xf32>
    %c16 = arith.constant 16 : index
    %c0_13 = arith.constant 0 : index
    %24 = vector.load %arg15[%c16, %c0_13] : memref<72x256xf32, #tpu.memory_space<vmem>>, vector<8x256xf32>
    tpu.vector_store %arg15[%c16, %c0_13], %23 {strides = array<i32>} : memref<72x256xf32, #tpu.memory_space<vmem>>, vector<8x256xf32>,
    %c1_i32 = arith.constant 1 : i32
    %25 = tpu.dynamic_rotate %9 by %c1_i32 dim 1 : vector<8x256xf32>, i32 -> vector<8x256xf32>
    %c3 = arith.constant 3 : index
    %c0_14 = arith.constant 0 : index
    %26 = vector.load %arg2[%c3, %c0_14] : memref<8x256xf32, #tpu.memory_space<vmem>>, vector<1x256xf32>
    %27 = vector.broadcast %26 : vector<1x256xf32> to vector<8x256xf32>
    %28 = arith.mulf %25, %27 : vector<8x256xf32>
    %c24 = arith.constant 24 : index
    %c0_15 = arith.constant 0 : index
    %29 = vector.load %arg15[%c24, %c0_15] : memref<72x256xf32, #tpu.memory_space<vmem>>, vector<8x256xf32>
    tpu.vector_store %arg15[%c24, %c0_15], %28 {strides = array<i32>} : memref<72x256xf32, #tpu.memory_space<vmem>>, vector<8x256xf32>,
    %c32 = arith.constant 32 : index
    %c0_16 = arith.constant 0 : index
    %30 = vector.load %arg15[%c32, %c0_16] : memref<72x256xf32, #tpu.memory_space<vmem>>, vector<8x256xf32>
    tpu.vector_store %arg15[%c32, %c0_16], %9 {strides = array<i32>} : memref<72x256xf32, #tpu.memory_space<vmem>>, vector<8x256xf32>,
    %c255_i32 = arith.constant 255 : i32
    %31 = tpu.dynamic_rotate %9 by %c255_i32 dim 1 : vector<8x256xf32>, i32 -> vector<8x256xf32>
    %c4 = arith.constant 4 : index
    %c0_17 = arith.constant 0 : index
    %32 = vector.load %arg2[%c4, %c0_17] : memref<8x256xf32, #tpu.memory_space<vmem>>, vector<1x256xf32>
    %33 = vector.broadcast %32 : vector<1x256xf32> to vector<8x256xf32>
    %34 = arith.mulf %31, %33 : vector<8x256xf32>
    %c40 = arith.constant 40 : index
    %c0_18 = arith.constant 0 : index
    %35 = vector.load %arg15[%c40, %c0_18] : memref<72x256xf32, #tpu.memory_space<vmem>>, vector<8x256xf32>
    tpu.vector_store %arg15[%c40, %c0_18], %34 {strides = array<i32>} : memref<72x256xf32, #tpu.memory_space<vmem>>, vector<8x256xf32>,
    %c241_i32 = arith.constant 241 : i32
    %36 = tpu.dynamic_rotate %9 by %c241_i32 dim 1 : vector<8x256xf32>, i32 -> vector<8x256xf32>
    %c5 = arith.constant 5 : index
    %c0_19 = arith.constant 0 : index
    %37 = vector.load %arg2[%c5, %c0_19] : memref<8x256xf32, #tpu.memory_space<vmem>>, vector<1x256xf32>
    %38 = vector.broadcast %37 : vector<1x256xf32> to vector<8x256xf32>
    %39 = arith.mulf %36, %38 : vector<8x256xf32>
    %c48 = arith.constant 48 : index
    %c0_20 = arith.constant 0 : index
    %40 = vector.load %arg15[%c48, %c0_20] : memref<72x256xf32, #tpu.memory_space<vmem>>, vector<8x256xf32>
    tpu.vector_store %arg15[%c48, %c0_20], %39 {strides = array<i32>} : memref<72x256xf32, #tpu.memory_space<vmem>>, vector<8x256xf32>,
    %c240_i32 = arith.constant 240 : i32
    %41 = tpu.dynamic_rotate %9 by %c240_i32 dim 1 : vector<8x256xf32>, i32 -> vector<8x256xf32>
    %c6 = arith.constant 6 : index
    %c0_21 = arith.constant 0 : index
    %42 = vector.load %arg2[%c6, %c0_21] : memref<8x256xf32, #tpu.memory_space<vmem>>, vector<1x256xf32>
    %43 = vector.broadcast %42 : vector<1x256xf32> to vector<8x256xf32>
    %44 = arith.mulf %41, %43 : vector<8x256xf32>
    %c56 = arith.constant 56 : index
    %c0_22 = arith.constant 0 : index
    %45 = vector.load %arg15[%c56, %c0_22] : memref<72x256xf32, #tpu.memory_space<vmem>>, vector<8x256xf32>
    tpu.vector_store %arg15[%c56, %c0_22], %44 {strides = array<i32>} : memref<72x256xf32, #tpu.memory_space<vmem>>, vector<8x256xf32>,
    %c239_i32 = arith.constant 239 : i32
    %46 = tpu.dynamic_rotate %9 by %c239_i32 dim 1 : vector<8x256xf32>, i32 -> vector<8x256xf32>
    %c7 = arith.constant 7 : index
    %c0_23 = arith.constant 0 : index
    %47 = vector.load %arg2[%c7, %c0_23] : memref<8x256xf32, #tpu.memory_space<vmem>>, vector<1x256xf32>
    %48 = vector.broadcast %47 : vector<1x256xf32> to vector<8x256xf32>
    %49 = arith.mulf %46, %48 : vector<8x256xf32>
    %c64 = arith.constant 64 : index
    %c0_24 = arith.constant 0 : index
    %50 = vector.load %arg15[%c64, %c0_24] : memref<72x256xf32, #tpu.memory_space<vmem>>, vector<8x256xf32>
    tpu.vector_store %arg15[%c64, %c0_24], %49 {strides = array<i32>} : memref<72x256xf32, #tpu.memory_space<vmem>>, vector<8x256xf32>,
    %c0_25 = arith.constant 0 : index
    %c0_26 = arith.constant 0 : index
    %51 = vector.load %arg5[%c0_25, %c0_26] : memref<32x72xf32, #tpu.memory_space<vmem>>, vector<32x72xf32>
    %c0_27 = arith.constant 0 : index
    %c0_28 = arith.constant 0 : index
    %52 = vector.load %arg15[%c0_27, %c0_28] : memref<72x256xf32, #tpu.memory_space<vmem>>, vector<72x256xf32>
    %cst_29 = arith.constant dense<0.000000e+00> : vector<32x256xf32>
    %53 = tpu.matmul %51, %52, %cst_29 {dimension_numbers = #tpu.dot_dimension_numbers<[1], [0], [0], [1], [0, 0, 1, 1], [], []>} : vector<32x72xf32>, vector<72x256xf32>, vector<32x256xf32> -> vector<32x256xf32>
    %c0_30 = arith.constant 0 : index
    %c0_31 = arith.constant 0 : index
    %54 = vector.load %arg6[%c0_30, %c0_31] : memref<32x1xf32, #tpu.memory_space<vmem>>, vector<32x1xf32>
    %55 = vector.broadcast %54 : vector<32x1xf32> to vector<32x256xf32>
    %56 = arith.addf %53, %55 : vector<32x256xf32>
    %cst_32 = arith.constant 0.000000e+00 : f32
    %57 = vector.broadcast %cst_32 : f32 to vector<32x256xf32>
    %58 = arith.maximumf %56, %57 : vector<32x256xf32>
    %c0_33 = arith.constant 0 : index
    %c0_34 = arith.constant 0 : index
    %59 = vector.load %arg7[%c0_33, %c0_34] : memref<32x32xbf16, #tpu.memory_space<vmem>>, vector<32x32xbf16>
    %60 = arith.truncf %58 : vector<32x256xf32> to vector<32x256xbf16>
    %cst_35 = arith.constant dense<0.000000e+00> : vector<32x256xf32>
    %61 = tpu.matmul %59, %60, %cst_35 {dimension_numbers = #tpu.dot_dimension_numbers<[1], [0], [0], [1], [0, 0, 1, 1], [], []>} : vector<32x32xbf16>, vector<32x256xbf16>, vector<32x256xf32> -> vector<32x256xf32>
    %c0_36 = arith.constant 0 : index
    %c0_37 = arith.constant 0 : index
    %62 = vector.load %arg8[%c0_36, %c0_37] : memref<32x1xf32, #tpu.memory_space<vmem>>, vector<32x1xf32>
    %63 = vector.broadcast %62 : vector<32x1xf32> to vector<32x256xf32>
    %64 = arith.addf %61, %63 : vector<32x256xf32>
    %cst_38 = arith.constant 0.000000e+00 : f32
    %65 = vector.broadcast %cst_38 : f32 to vector<32x256xf32>
    %66 = arith.maximumf %64, %65 : vector<32x256xf32>
    %c17_i32_39 = arith.constant 17 : i32
    %67 = tpu.dynamic_rotate %66 by %c17_i32_39 dim 1 : vector<32x256xf32>, i32 -> vector<32x256xf32>
    %c0_40 = arith.constant 0 : index
    %c0_41 = arith.constant 0 : index
    %68 = vector.load %arg2[%c0_40, %c0_41] : memref<8x256xf32, #tpu.memory_space<vmem>>, vector<1x256xf32>
    %69 = vector.broadcast %68 : vector<1x256xf32> to vector<32x256xf32>
    %70 = arith.mulf %67, %69 : vector<32x256xf32>
    %71 = arith.truncf %70 : vector<32x256xf32> to vector<32x256xbf16>
    %c0_42 = arith.constant 0 : index
    %c0_43 = arith.constant 0 : index
    %72 = vector.load %arg16[%c0_42, %c0_43] : memref<288x256xbf16, #tpu.memory_space<vmem>>, vector<32x256xbf16>
    tpu.vector_store %arg16[%c0_42, %c0_43], %71 {strides = array<i32>} : memref<288x256xbf16, #tpu.memory_space<vmem>>, vector<32x256xbf16>,
    %c16_i32_44 = arith.constant 16 : i32
    %73 = tpu.dynamic_rotate %66 by %c16_i32_44 dim 1 : vector<32x256xf32>, i32 -> vector<32x256xf32>
    %c1_45 = arith.constant 1 : index
    %c0_46 = arith.constant 0 : index
    %74 = vector.load %arg2[%c1_45, %c0_46] : memref<8x256xf32, #tpu.memory_space<vmem>>, vector<1x256xf32>
    %75 = vector.broadcast %74 : vector<1x256xf32> to vector<32x256xf32>
    %76 = arith.mulf %73, %75 : vector<32x256xf32>
    %77 = arith.truncf %76 : vector<32x256xf32> to vector<32x256xbf16>
    %c32_47 = arith.constant 32 : index
    %c0_48 = arith.constant 0 : index
    %78 = vector.load %arg16[%c32_47, %c0_48] : memref<288x256xbf16, #tpu.memory_space<vmem>>, vector<32x256xbf16>
    tpu.vector_store %arg16[%c32_47, %c0_48], %77 {strides = array<i32>} : memref<288x256xbf16, #tpu.memory_space<vmem>>, vector<32x256xbf16>,
    %c15_i32_49 = arith.constant 15 : i32
    %79 = tpu.dynamic_rotate %66 by %c15_i32_49 dim 1 : vector<32x256xf32>, i32 -> vector<32x256xf32>
    %c2_50 = arith.constant 2 : index
    %c0_51 = arith.constant 0 : index
    %80 = vector.load %arg2[%c2_50, %c0_51] : memref<8x256xf32, #tpu.memory_space<vmem>>, vector<1x256xf32>
    %81 = vector.broadcast %80 : vector<1x256xf32> to vector<32x256xf32>
    %82 = arith.mulf %79, %81 : vector<32x256xf32>
    %83 = arith.truncf %82 : vector<32x256xf32> to vector<32x256xbf16>
    %c64_52 = arith.constant 64 : index
    %c0_53 = arith.constant 0 : index
    %84 = vector.load %arg16[%c64_52, %c0_53] : memref<288x256xbf16, #tpu.memory_space<vmem>>, vector<32x256xbf16>
    tpu.vector_store %arg16[%c64_52, %c0_53], %83 {strides = array<i32>} : memref<288x256xbf16, #tpu.memory_space<vmem>>, vector<32x256xbf16>,
    %c1_i32_54 = arith.constant 1 : i32
    %85 = tpu.dynamic_rotate %66 by %c1_i32_54 dim 1 : vector<32x256xf32>, i32 -> vector<32x256xf32>
    %c3_55 = arith.constant 3 : index
    %c0_56 = arith.constant 0 : index
    %86 = vector.load %arg2[%c3_55, %c0_56] : memref<8x256xf32, #tpu.memory_space<vmem>>, vector<1x256xf32>
    %87 = vector.broadcast %86 : vector<1x256xf32> to vector<32x256xf32>
    %88 = arith.mulf %85, %87 : vector<32x256xf32>
    %89 = arith.truncf %88 : vector<32x256xf32> to vector<32x256xbf16>
    %c96 = arith.constant 96 : index
    %c0_57 = arith.constant 0 : index
    %90 = vector.load %arg16[%c96, %c0_57] : memref<288x256xbf16, #tpu.memory_space<vmem>>, vector<32x256xbf16>
    tpu.vector_store %arg16[%c96, %c0_57], %89 {strides = array<i32>} : memref<288x256xbf16, #tpu.memory_space<vmem>>, vector<32x256xbf16>,
    %91 = arith.truncf %66 : vector<32x256xf32> to vector<32x256xbf16>
    %c128 = arith.constant 128 : index
    %c0_58 = arith.constant 0 : index
    %92 = vector.load %arg16[%c128, %c0_58] : memref<288x256xbf16, #tpu.memory_space<vmem>>, vector<32x256xbf16>
    tpu.vector_store %arg16[%c128, %c0_58], %91 {strides = array<i32>} : memref<288x256xbf16, #tpu.memory_space<vmem>>, vector<32x256xbf16>,
    %c255_i32_59 = arith.constant 255 : i32
    %93 = tpu.dynamic_rotate %66 by %c255_i32_59 dim 1 : vector<32x256xf32>, i32 -> vector<32x256xf32>
    %c4_60 = arith.constant 4 : index
    %c0_61 = arith.constant 0 : index
    %94 = vector.load %arg2[%c4_60, %c0_61] : memref<8x256xf32, #tpu.memory_space<vmem>>, vector<1x256xf32>
    %95 = vector.broadcast %94 : vector<1x256xf32> to vector<32x256xf32>
    %96 = arith.mulf %93, %95 : vector<32x256xf32>
    %97 = arith.truncf %96 : vector<32x256xf32> to vector<32x256xbf16>
    %c160 = arith.constant 160 : index
    %c0_62 = arith.constant 0 : index
    %98 = vector.load %arg16[%c160, %c0_62] : memref<288x256xbf16, #tpu.memory_space<vmem>>, vector<32x256xbf16>
    tpu.vector_store %arg16[%c160, %c0_62], %97 {strides = array<i32>} : memref<288x256xbf16, #tpu.memory_space<vmem>>, vector<32x256xbf16>,
    %c241_i32_63 = arith.constant 241 : i32
    %99 = tpu.dynamic_rotate %66 by %c241_i32_63 dim 1 : vector<32x256xf32>, i32 -> vector<32x256xf32>
    %c5_64 = arith.constant 5 : index
    %c0_65 = arith.constant 0 : index
    %100 = vector.load %arg2[%c5_64, %c0_65] : memref<8x256xf32, #tpu.memory_space<vmem>>, vector<1x256xf32>
    %101 = vector.broadcast %100 : vector<1x256xf32> to vector<32x256xf32>
    %102 = arith.mulf %99, %101 : vector<32x256xf32>
    %103 = arith.truncf %102 : vector<32x256xf32> to vector<32x256xbf16>
    %c192 = arith.constant 192 : index
    %c0_66 = arith.constant 0 : index
    %104 = vector.load %arg16[%c192, %c0_66] : memref<288x256xbf16, #tpu.memory_space<vmem>>, vector<32x256xbf16>
    tpu.vector_store %arg16[%c192, %c0_66], %103 {strides = array<i32>} : memref<288x256xbf16, #tpu.memory_space<vmem>>, vector<32x256xbf16>,
    %c240_i32_67 = arith.constant 240 : i32
    %105 = tpu.dynamic_rotate %66 by %c240_i32_67 dim 1 : vector<32x256xf32>, i32 -> vector<32x256xf32>
    %c6_68 = arith.constant 6 : index
    %c0_69 = arith.constant 0 : index
    %106 = vector.load %arg2[%c6_68, %c0_69] : memref<8x256xf32, #tpu.memory_space<vmem>>, vector<1x256xf32>
    %107 = vector.broadcast %106 : vector<1x256xf32> to vector<32x256xf32>
    %108 = arith.mulf %105, %107 : vector<32x256xf32>
    %109 = arith.truncf %108 : vector<32x256xf32> to vector<32x256xbf16>
    %c224 = arith.constant 224 : index
    %c0_70 = arith.constant 0 : index
    %110 = vector.load %arg16[%c224, %c0_70] : memref<288x256xbf16, #tpu.memory_space<vmem>>, vector<32x256xbf16>
    tpu.vector_store %arg16[%c224, %c0_70], %109 {strides = array<i32>} : memref<288x256xbf16, #tpu.memory_space<vmem>>, vector<32x256xbf16>,
    %c239_i32_71 = arith.constant 239 : i32
    %111 = tpu.dynamic_rotate %66 by %c239_i32_71 dim 1 : vector<32x256xf32>, i32 -> vector<32x256xf32>
    %c7_72 = arith.constant 7 : index
    %c0_73 = arith.constant 0 : index
    %112 = vector.load %arg2[%c7_72, %c0_73] : memref<8x256xf32, #tpu.memory_space<vmem>>, vector<1x256xf32>
    %113 = vector.broadcast %112 : vector<1x256xf32> to vector<32x256xf32>
    %114 = arith.mulf %111, %113 : vector<32x256xf32>
    %115 = arith.truncf %114 : vector<32x256xf32> to vector<32x256xbf16>
    %c256 = arith.constant 256 : index
    %c0_74 = arith.constant 0 : index
    %116 = vector.load %arg16[%c256, %c0_74] : memref<288x256xbf16, #tpu.memory_space<vmem>>, vector<32x256xbf16>
    tpu.vector_store %arg16[%c256, %c0_74], %115 {strides = array<i32>} : memref<288x256xbf16, #tpu.memory_space<vmem>>, vector<32x256xbf16>,
    %c0_75 = arith.constant 0 : index
    %c0_76 = arith.constant 0 : index
    %117 = vector.load %arg9[%c0_75, %c0_76] : memref<8x288xbf16, #tpu.memory_space<vmem>>, vector<8x288xbf16>
    %c0_77 = arith.constant 0 : index
    %c0_78 = arith.constant 0 : index
    %118 = vector.load %arg16[%c0_77, %c0_78] : memref<288x256xbf16, #tpu.memory_space<vmem>>, vector<288x256xbf16>
    %cst_79 = arith.constant dense<0.000000e+00> : vector<8x256xf32>
    %119 = tpu.matmul %117, %118, %cst_79 {dimension_numbers = #tpu.dot_dimension_numbers<[1], [0], [0], [1], [0, 0, 1, 1], [], []>} : vector<8x288xbf16>, vector<288x256xbf16>, vector<8x256xf32> -> vector<8x256xf32>
    %c0_80 = arith.constant 0 : index
    %c0_81 = arith.constant 0 : index
    %120 = vector.load %arg10[%c0_80, %c0_81] : memref<8x1xf32, #tpu.memory_space<vmem>>, vector<8x1xf32>
    %121 = vector.broadcast %120 : vector<8x1xf32> to vector<8x256xf32>
    %122 = arith.addf %119, %121 : vector<8x256xf32>
    %c0_82 = arith.constant 0 : index
    %c0_83 = arith.constant 0 : index
    %123 = vector.load %arg11[%c0_82, %c0_83] : memref<8x1xf32, #tpu.memory_space<vmem>>, vector<8x1xf32>
    %124 = math.tanh %122 : vector<8x256xf32>
    %125 = vector.broadcast %123 : vector<8x1xf32> to vector<8x256xf32>
    %126 = arith.mulf %125, %124 : vector<8x256xf32>
    %c4_i32 = arith.constant 4 : i32
    %127 = tpu.dynamic_rotate %122 by %c4_i32 dim 0 : vector<8x256xf32>, i32 -> vector<8x256xf32>
    %c0_84 = arith.constant 0 : index
    %c0_85 = arith.constant 0 : index
    %128 = vector.load %arg12[%c0_84, %c0_85] : memref<8x1xf32, #tpu.memory_space<vmem>>, vector<8x1xf32>
    %129 = vector.broadcast %128 : vector<8x1xf32> to vector<8x256xf32>
    %130 = arith.mulf %127, %129 : vector<8x256xf32>
    %131 = arith.addf %1, %130 : vector<8x256xf32>
    %132 = math.exp %126 : vector<8x256xf32>
    %133 = arith.mulf %131, %132 : vector<8x256xf32>
    %c0_86 = arith.constant 0 : index
    %c0_87 = arith.constant 0 : index
    %c0_88 = arith.constant 0 : index
    %134 = vector.load %arg13[%c0_86, %c0_87, %c0_88] : memref<1x8x256xf32, #tpu.memory_space<vmem>>, vector<1x8x256xf32>
    %135 = vector.shape_cast %134 : vector<1x8x256xf32> to vector<8x256xf32>
    %136 = vector.shape_cast %133 : vector<8x256xf32> to vector<1x8x256xf32>
    tpu.vector_store %arg13[%c0_86, %c0_87, %c0_88], %136 {strides = array<i32>} : memref<1x8x256xf32, #tpu.memory_space<vmem>>, vector<1x8x256xf32>,
    %137 = vector.shape_cast %126 : vector<8x256xf32> to vector<1x8x256xf32>
    %cst_89 = arith.constant dense<0.000000e+00> : vector<1xf32>
    %138 = vector.multi_reduction <add>, %137, %cst_89 [1, 2] : vector<1x8x256xf32> to vector<1xf32>
    %139 = vector.shape_cast %138 : vector<1xf32> to vector<1x1x1xf32>
    %140 = vector.extract %139[0, 0, 0] : f32 from vector<1x1x1xf32>
    %141 = vector.broadcast %140 : f32 to vector<1x128xf32>
    %c0_90 = arith.constant 0 : index
    %c0_91 = arith.constant 0 : index
    %c0_92 = arith.constant 0 : index
    %142 = vector.load %arg14[%c0_90, %c0_91, %c0_92] : memref<1x1x128xf32, #tpu.memory_space<vmem>>, vector<1x1x128xf32>
    %143 = vector.shape_cast %142 : vector<1x1x128xf32> to vector<1x128xf32>
    %144 = vector.shape_cast %141 : vector<1x128xf32> to vector<1x1x128xf32>
    tpu.vector_store %arg14[%c0_90, %c0_91, %c0_92], %144 {strides = array<i32>} : memref<1x1x128xf32, #tpu.memory_space<vmem>>, vector<1x1x128xf32>,
    return
  }
  func.func @transform_0(%arg0: i32) -> (i32, i32, i32) {
    %c0_i32 = arith.constant 0 : i32
    %c0_i32_0 = arith.constant 0 : i32
    %c0_i32_1 = arith.constant 0 : i32
    return %arg0, %c0_i32, %c0_i32_0 : i32, i32, i32
  }
  func.func @transform_1(%arg0: i32) -> (i32, i32) {
    %c0_i32 = arith.constant 0 : i32
    %c0_i32_0 = arith.constant 0 : i32
    %c0_i32_1 = arith.constant 0 : i32
    return %c0_i32, %c0_i32_0 : i32, i32
  }
  func.func @transform_2(%arg0: i32) -> (i32, i32) {
    %c0_i32 = arith.constant 0 : i32
    %c0_i32_0 = arith.constant 0 : i32
    %c0_i32_1 = arith.constant 0 : i32
    return %c0_i32, %c0_i32_0 : i32, i32
  }
  func.func @transform_3(%arg0: i32) -> (i32, i32) {
    %c0_i32 = arith.constant 0 : i32
    %c0_i32_0 = arith.constant 0 : i32
    %c0_i32_1 = arith.constant 0 : i32
    return %c0_i32, %c0_i32_0 : i32, i32
  }
  func.func @transform_4(%arg0: i32) -> (i32, i32) {
    %c0_i32 = arith.constant 0 : i32
    %c0_i32_0 = arith.constant 0 : i32
    %c0_i32_1 = arith.constant 0 : i32
    return %c0_i32, %c0_i32_0 : i32, i32
  }
  func.func @transform_5(%arg0: i32) -> (i32, i32) {
    %c0_i32 = arith.constant 0 : i32
    %c0_i32_0 = arith.constant 0 : i32
    %c0_i32_1 = arith.constant 0 : i32
    return %c0_i32, %c0_i32_0 : i32, i32
  }
  func.func @transform_6(%arg0: i32) -> (i32, i32) {
    %c0_i32 = arith.constant 0 : i32
    %c0_i32_0 = arith.constant 0 : i32
    %c0_i32_1 = arith.constant 0 : i32
    return %c0_i32, %c0_i32_0 : i32, i32
  }
  func.func @transform_7(%arg0: i32) -> (i32, i32) {
    %c0_i32 = arith.constant 0 : i32
    %c0_i32_0 = arith.constant 0 : i32
    %c0_i32_1 = arith.constant 0 : i32
    return %c0_i32, %c0_i32_0 : i32, i32
  }
  func.func @transform_8(%arg0: i32) -> (i32, i32) {
    %c0_i32 = arith.constant 0 : i32
    %c0_i32_0 = arith.constant 0 : i32
    %c0_i32_1 = arith.constant 0 : i32
    return %c0_i32, %c0_i32_0 : i32, i32
  }
  func.func @transform_9(%arg0: i32) -> (i32, i32) {
    %c0_i32 = arith.constant 0 : i32
    %c0_i32_0 = arith.constant 0 : i32
    %c0_i32_1 = arith.constant 0 : i32
    return %c0_i32, %c0_i32_0 : i32, i32
  }
  func.func @transform_10(%arg0: i32) -> (i32, i32) {
    %c0_i32 = arith.constant 0 : i32
    %c0_i32_0 = arith.constant 0 : i32
    %c0_i32_1 = arith.constant 0 : i32
    return %c0_i32, %c0_i32_0 : i32, i32
  }
  func.func @transform_11(%arg0: i32) -> (i32, i32) {
    %c0_i32 = arith.constant 0 : i32
    %c0_i32_0 = arith.constant 0 : i32
    %c0_i32_1 = arith.constant 0 : i32
    return %c0_i32, %c0_i32_0 : i32, i32
  }
  func.func @transform_12(%arg0: i32) -> (i32, i32, i32) {
    %c0_i32 = arith.constant 0 : i32
    %c0_i32_0 = arith.constant 0 : i32
    %c0_i32_1 = arith.constant 0 : i32
    return %arg0, %c0_i32, %c0_i32_0 : i32, i32, i32
  }
  func.func @transform_13(%arg0: i32) -> (i32, i32, i32) {
    %c0_i32 = arith.constant 0 : i32
    %c0_i32_0 = arith.constant 0 : i32
    %c0_i32_1 = arith.constant 0 : i32
    return %arg0, %c0_i32, %c0_i32_0 : i32, i32, i32
  }
}

</mosaic_0001>

<llo_original>
// kernel: coupling_forward.1
$region0: #{coupling_forward.1}
  #allocation0 [shape = 'u32[]', space=smem, size = 0x4, offset = 0x4, fixed_abs, tag = 'smem constant byte address 0x4 - core index']
  #allocation1 [shape = 'u32[144,128]{1,0:T(1,128)}', space=vmem, size = 0x12000, scoped, tag = 'internal scratch']
  #allocation2 [shape = 'f32[72,256]{1,0:T(8,128)}', space=vmem, size = 0x12000, scoped, tag = 'scratch operand']
  #allocation3 [shape = 'bf16[288,256]{1,0:T(16,128)(2,1)}', space=vmem, size = 0x24000, scoped, tag = 'scratch operand']
  %s0 = inlined_call_operand.vmem [shape: f32[2,8,256], index: 0, kind: input, shape index: {}, may-alias: {0,12}]
  %s1 = inlined_call_operand.vmem [shape: f32[8,256], index: 1, kind: input, shape index: {}]
  %s2 = inlined_call_operand.vmem [shape: f32[8,1], index: 2, kind: input, shape index: {}]
  %s3 = inlined_call_operand.vmem [shape: f32[8,1], index: 3, kind: input, shape index: {}]
  %s4 = inlined_call_operand.vmem [shape: f32[32,72], index: 4, kind: input, shape index: {}]
  %s5 = inlined_call_operand.vmem [shape: f32[32,1], index: 5, kind: input, shape index: {}]
  %s6 = inlined_call_operand.vmem [shape: bf16[32,32], index: 6, kind: input, shape index: {}]
  %s7 = inlined_call_operand.vmem [shape: f32[32,1], index: 7, kind: input, shape index: {}]
  %s8 = inlined_call_operand.vmem [shape: bf16[8,288], index: 8, kind: input, shape index: {}]
  %s9 = inlined_call_operand.vmem [shape: f32[8,1], index: 9, kind: input, shape index: {}]
  %s10 = inlined_call_operand.vmem [shape: f32[8,1], index: 10, kind: input, shape index: {}]
  %s11 = inlined_call_operand.vmem [shape: f32[8,1], index: 11, kind: input, shape index: {}]
  %s12 = inlined_call_operand.vmem [shape: f32[2,8,256], index: 12, kind: output, shape index: {0}, may-alias: {0,12}]
  %s13 = inlined_call_operand.vmem [shape: f32[2,1,128], index: 13, kind: output, shape index: {1}]
  %14 = xla_tuple %s12, %s13
  %s15 = sld [smem:[#allocation0]]
  $region89: #{coupling_forward.1} parent=0
    _
  %s17 = ssub.s32 1, %s15
  %s18 = scalar_select 0, %s17, %s15
  loop: start=0, step=1, limit=4
  $region2: #{coupling_forward.1} parent=0 // loop_pre_header
    _
  $region3: #{coupling_forward.1} parent=0 // loop_header
    %s20 = sphi 0, %s24
    %p21 = scmp.ge.s32.totalorder %s20, 4
    %s30 = sphi 0, %s32
    %s33 = sphi 0, %s30
    %s34 = sphi 0, %s33
    %s50 = sphi 0, %s34
    %s54 = sphi 0, %s54
    %s56 = sphi 0, %s54
    %s57 = sphi 0, %s56
    %s71 = sphi 0, %s57
    %s75 = sphi 0, %s75
    %s77 = sphi 0, %s75
    %s78 = sphi 0, %s77
    %s92 = sphi 0, %s78
    %s96 = sphi 0, %s96
    %s98 = sphi 0, %s96
    %s99 = sphi 0, %s98
    %s113 = sphi 0, %s99
    %s117 = sphi 0, %s117
    %s119 = sphi 0, %s117
    %s120 = sphi 0, %s119
    %s134 = sphi 0, %s120
    %s138 = sphi 0, %s138
    %s140 = sphi 0, %s138
    %s141 = sphi 0, %s140
    %s155 = sphi 0, %s141
    %s159 = sphi 0, %s159
    %s161 = sphi 0, %s159
    %s162 = sphi 0, %s161
    %s176 = sphi 0, %s162
    %s180 = sphi 0, %s180
    %s182 = sphi 0, %s180
    %s183 = sphi 0, %s182
    %s197 = sphi 0, %s183
    %s201 = sphi 0, %s201
    %s203 = sphi 0, %s201
    %s204 = sphi 0, %s203
    %s218 = sphi 0, %s204
    %s222 = sphi 0, %s222
    %s224 = sphi 0, %s222
    %s225 = sphi 0, %s224
    %s239 = sphi 0, %s225
    %s243 = sphi 0, %s243
    %s245 = sphi 0, %s243
    %s246 = sphi 0, %s245
    %s260 = sphi 0, %s246
    %s264 = sphi 0, %s264
    %s266 = sphi 0, %s264
    %s267 = sphi 0, %s266
    %s281 = sphi 0, %s267
    %s287 = sphi 0, %s289
    %s290 = sphi 0, %s287
    %s291 = sphi 0, %s290
    %s307 = sphi 0, %s291
    %s313 = sphi 0, %s315
    %s316 = sphi 0, %s313
    %s317 = sphi 0, %s316
    %s333 = sphi 0, %s317
  $region4: #{coupling_forward.1} parent=0 // loop_header_branch
    %23 = sbr.rel (%p21) target = $region8
  $region5: #{coupling_forward.1} parent=0 // loop_body
    %s25 = ssub.s32 %s20, 1
    %s26 = ssub.s32 %s20, 2
    %s27 = sadd.s32 %s20, 1
    %s28 = ssub.s32 %s20, %s27
    %p29 = scmp.eq.s32.totalorder %s28, 0
    %s31 = sadd.s32 %s30, 1
    %s32 = scalar_select %p29, %s30, %s31
    %p35 = pneg %p29
    %p36 = scmp.eq.s32.totalorder %s20, 1
    %p37 = por %p35, %p36
    %p38 = scmp.ne.s32.totalorder %s30, %s33
    %p39 = scmp.eq.s32.totalorder %s20, 0
    %p40 = por %p38, %p39
    %p41 = scmp.ne.s32.totalorder %s30, %s33
    %p42 = scmp.eq.s32.totalorder %s25, 1
    %p43 = por %p41, %p42
    %p44 = scmp.ne.s32.totalorder %s33, %s34
    %p45 = scmp.eq.s32.totalorder %s25, 0
    %p46 = por %p44, %p45
    %p47 = scmp.ne.s32.totalorder %s33, %s34
    %p48 = scmp.eq.s32.totalorder %s26, 1
    %p49 = por %p47, %p48
    %p51 = scmp.ne.s32.totalorder %s34, %s50
    %p52 = scmp.eq.s32.totalorder %s26, 0
    %p53 = por %p51, %p52
    %s55 = sadd.s32 %s54, 1
    %p58 = scmp.eq.s32.totalorder %s20, 1
    %p59 = scmp.ne.s32.totalorder %s54, %s56
    %p60 = scmp.eq.s32.totalorder %s20, 0
    %p61 = por %p59, %p60
    %p62 = scmp.ne.s32.totalorder %s54, %s56
    %p63 = scmp.eq.s32.totalorder %s25, 1
    %p64 = por %p62, %p63
    %p65 = scmp.ne.s32.totalorder %s56, %s57
    %p66 = scmp.eq.s32.totalorder %s25, 0
    %p67 = por %p65, %p66
    %p68 = scmp.ne.s32.totalorder %s56, %s57
    %p69 = scmp.eq.s32.totalorder %s26, 1
    %p70 = por %p68, %p69
    %p72 = scmp.ne.s32.totalorder %s57, %s71
    %p73 = scmp.eq.s32.totalorder %s26, 0
    %p74 = por %p72, %p73
    %s76 = sadd.s32 %s75, 1
    %p79 = scmp.eq.s32.totalorder %s20, 1
    %p80 = scmp.ne.s32.totalorder %s75, %s77
    %p81 = scmp.eq.s32.totalorder %s20, 0
    %p82 = por %p80, %p81
    %p83 = scmp.ne.s32.totalorder %s75, %s77
    %p84 = scmp.eq.s32.totalorder %s25, 1
    %p85 = por %p83, %p84
    %p86 = scmp.ne.s32.totalorder %s77, %s78
    %p87 = scmp.eq.s32.totalorder %s25, 0
    %p88 = por %p86, %p87
    %p89 = scmp.ne.s32.totalorder %s77, %s78
    %p90 = scmp.eq.s32.totalorder %s26, 1
    %p91 = por %p89, %p90
    %p93 = scmp.ne.s32.totalorder %s78, %s92
    %p94 = scmp.eq.s32.totalorder %s26, 0
    %p95 = por %p93, %p94
    %s97 = sadd.s32 %s96, 1
    %p100 = scmp.eq.s32.totalorder %s20, 1
    %p101 = scmp.ne.s32.totalorder %s96, %s98
    %p102 = scmp.eq.s32.totalorder %s20, 0
    %p103 = por %p101, %p102
    %p104 = scmp.ne.s32.totalorder %s96, %s98
    %p105 = scmp.eq.s32.totalorder %s25, 1
    %p106 = por %p104, %p105
    %p107 = scmp.ne.s32.totalorder %s98, %s99
    %p108 = scmp.eq.s32.totalorder %s25, 0
    %p109 = por %p107, %p108
    %p110 = scmp.ne.s32.totalorder %s98, %s99
    %p111 = scmp.eq.s32.totalorder %s26, 1
    %p112 = por %p110, %p111
    %p114 = scmp.ne.s32.totalorder %s99, %s113
    %p115 = scmp.eq.s32.totalorder %s26, 0
    %p116 = por %p114, %p115
    %s118 = sadd.s32 %s117, 1
    %p121 = scmp.eq.s32.totalorder %s20, 1
    %p122 = scmp.ne.s32.totalorder %s117, %s119
    %p123 = scmp.eq.s32.totalorder %s20, 0
    %p124 = por %p122, %p123
    %p125 = scmp.ne.s32.totalorder %s117, %s119
    %p126 = scmp.eq.s32.totalorder %s25, 1
    %p127 = por %p125, %p126
    %p128 = scmp.ne.s32.totalorder %s119, %s120
    %p129 = scmp.eq.s32.totalorder %s25, 0
    %p130 = por %p128, %p129
    %p131 = scmp.ne.s32.totalorder %s119, %s120
    %p132 = scmp.eq.s32.totalorder %s26, 1
    %p133 = por %p131, %p132
    %p135 = scmp.ne.s32.totalorder %s120, %s134
    %p136 = scmp.eq.s32.totalorder %s26, 0
    %p137 = por %p135, %p136
    %s139 = sadd.s32 %s138, 1
    %p142 = scmp.eq.s32.totalorder %s20, 1
    %p143 = scmp.ne.s32.totalorder %s138, %s140
    %p144 = scmp.eq.s32.totalorder %s20, 0
    %p145 = por %p143, %p144
    %p146 = scmp.ne.s32.totalorder %s138, %s140
    %p147 = scmp.eq.s32.totalorder %s25, 1
    %p148 = por %p146, %p147
    %p149 = scmp.ne.s32.totalorder %s140, %s141
    %p150 = scmp.eq.s32.totalorder %s25, 0
    %p151 = por %p149, %p150
    %p152 = scmp.ne.s32.totalorder %s140, %s141
    %p153 = scmp.eq.s32.totalorder %s26, 1
    %p154 = por %p152, %p153
    %p156 = scmp.ne.s32.totalorder %s141, %s155
    %p157 = scmp.eq.s32.totalorder %s26, 0
    %p158 = por %p156, %p157
    %s160 = sadd.s32 %s159, 1
    %p163 = scmp.eq.s32.totalorder %s20, 1
    %p164 = scmp.ne.s32.totalorder %s159, %s161
    %p165 = scmp.eq.s32.totalorder %s20, 0
    %p166 = por %p164, %p165
    %p167 = scmp.ne.s32.totalorder %s159, %s161
    %p168 = scmp.eq.s32.totalorder %s25, 1
    %p169 = por %p167, %p168
    %p170 = scmp.ne.s32.totalorder %s161, %s162
    %p171 = scmp.eq.s32.totalorder %s25, 0
    %p172 = por %p170, %p171
    %p173 = scmp.ne.s32.totalorder %s161, %s162
    %p174 = scmp.eq.s32.totalorder %s26, 1
    %p175 = por %p173, %p174
    %p177 = scmp.ne.s32.totalorder %s162, %s176
    %p178 = scmp.eq.s32.totalorder %s26, 0
    %p179 = por %p177, %p178
    %s181 = sadd.s32 %s180, 1
    %p184 = scmp.eq.s32.totalorder %s20, 1
    %p185 = scmp.ne.s32.totalorder %s180, %s182
    %p186 = scmp.eq.s32.totalorder %s20, 0
    %p187 = por %p185, %p186
    %p188 = scmp.ne.s32.totalorder %s180, %s182
    %p189 = scmp.eq.s32.totalorder %s25, 1
    %p190 = por %p188, %p189
    %p191 = scmp.ne.s32.totalorder %s182, %s183
    %p192 = scmp.eq.s32.totalorder %s25, 0
    %p193 = por %p191, %p192
    %p194 = scmp.ne.s32.totalorder %s182, %s183
    %p195 = scmp.eq.s32.totalorder %s26, 1
    %p196 = por %p194, %p195
    %p198 = scmp.ne.s32.totalorder %s183, %s197
    %p199 = scmp.eq.s32.totalorder %s26, 0
    %p200 = por %p198, %p199
    %s202 = sadd.s32 %s201, 1
    %p205 = scmp.eq.s32.totalorder %s20, 1
    %p206 = scmp.ne.s32.totalorder %s201, %s203
    %p207 = scmp.eq.s32.totalorder %s20, 0
    %p208 = por %p206, %p207
    %p209 = scmp.ne.s32.totalorder %s201, %s203
    %p210 = scmp.eq.s32.totalorder %s25, 1
    %p211 = por %p209, %p210
    %p212 = scmp.ne.s32.totalorder %s203, %s204
    %p213 = scmp.eq.s32.totalorder %s25, 0
    %p214 = por %p212, %p213
    %p215 = scmp.ne.s32.totalorder %s203, %s204
    %p216 = scmp.eq.s32.totalorder %s26, 1
    %p217 = por %p215, %p216
    %p219 = scmp.ne.s32.totalorder %s204, %s218
    %p220 = scmp.eq.s32.totalorder %s26, 0
    %p221 = por %p219, %p220
    %s223 = sadd.s32 %s222, 1
    %p226 = scmp.eq.s32.totalorder %s20, 1
    %p227 = scmp.ne.s32.totalorder %s222, %s224
    %p228 = scmp.eq.s32.totalorder %s20, 0
    %p229 = por %p227, %p228
    %p230 = scmp.ne.s32.totalorder %s222, %s224
    %p231 = scmp.eq.s32.totalorder %s25, 1
    %p232 = por %p230, %p231
    %p233 = scmp.ne.s32.totalorder %s224, %s225
    %p234 = scmp.eq.s32.totalorder %s25, 0
    %p235 = por %p233, %p234
    %p236 = scmp.ne.s32.totalorder %s224, %s225
    %p237 = scmp.eq.s32.totalorder %s26, 1
    %p238 = por %p236, %p237
    %p240 = scmp.ne.s32.totalorder %s225, %s239
    %p241 = scmp.eq.s32.totalorder %s26, 0
    %p242 = por %p240, %p241
    %s244 = sadd.s32 %s243, 1
    %p247 = scmp.eq.s32.totalorder %s20, 1
    %p248 = scmp.ne.s32.totalorder %s243, %s245
    %p249 = scmp.eq.s32.totalorder %s20, 0
    %p250 = por %p248, %p249
    %p251 = scmp.ne.s32.totalorder %s243, %s245
    %p252 = scmp.eq.s32.totalorder %s25, 1
    %p253 = por %p251, %p252
    %p254 = scmp.ne.s32.totalorder %s245, %s246
    %p255 = scmp.eq.s32.totalorder %s25, 0
    %p256 = por %p254, %p255
    %p257 = scmp.ne.s32.totalorder %s245, %s246
    %p258 = scmp.eq.s32.totalorder %s26, 1
    %p259 = por %p257, %p258
    %p261 = scmp.ne.s32.totalorder %s246, %s260
    %p262 = scmp.eq.s32.totalorder %s26, 0
    %p263 = por %p261, %p262
    %s265 = sadd.s32 %s264, 1
    %p268 = scmp.eq.s32.totalorder %s20, 1
    %p269 = scmp.ne.s32.totalorder %s264, %s266
    %p270 = scmp.eq.s32.totalorder %s20, 0
    %p271 = por %p269, %p270
    %p272 = scmp.ne.s32.totalorder %s264, %s266
    %p273 = scmp.eq.s32.totalorder %s25, 1
    %p274 = por %p272, %p273
    %p275 = scmp.ne.s32.totalorder %s266, %s267
    %p276 = scmp.eq.s32.totalorder %s25, 0
    %p277 = por %p275, %p276
    %p278 = scmp.ne.s32.totalorder %s266, %s267
    %p279 = scmp.eq.s32.totalorder %s26, 1
    %p280 = por %p278, %p279
    %p282 = scmp.ne.s32.totalorder %s267, %s281
    %p283 = scmp.eq.s32.totalorder %s26, 0
    %p284 = por %p282, %p283
    %s285 = ssub.s32 %s20, %s27
    %p286 = scmp.eq.s32.totalorder %s285, 0
    %s288 = sadd.s32 %s287, 1
    %s289 = scalar_select %p286, %s287, %s288
    %p292 = pneg %p286
    %p293 = scmp.eq.s32.totalorder %s20, 1
    %p294 = por %p292, %p293
    %p295 = scmp.ne.s32.totalorder %s287, %s290
    %p296 = scmp.eq.s32.totalorder %s20, 0
    %p297 = por %p295, %p296
    %p298 = scmp.ne.s32.totalorder %s287, %s290
    %p299 = scmp.eq.s32.totalorder %s25, 1
    %p300 = por %p298, %p299
    %p301 = scmp.ne.s32.totalorder %s290, %s291
    %p302 = scmp.eq.s32.totalorder %s25, 0
    %p303 = por %p301, %p302
    %p304 = scmp.ne.s32.totalorder %s290, %s291
    %p305 = scmp.eq.s32.totalorder %s26, 1
    %p306 = por %p304, %p305
    %p308 = scmp.ne.s32.totalorder %s291, %s307
    %p309 = scmp.eq.s32.totalorder %s26, 0
    %p310 = por %p308, %p309
    %s311 = ssub.s32 %s20, %s27
    %p312 = scmp.eq.s32.totalorder %s311, 0
    %s314 = sadd.s32 %s313, 1
    %s315 = scalar_select %p312, %s313, %s314
    %p318 = pneg %p312
    %p319 = scmp.eq.s32.totalorder %s20, 1
    %p320 = por %p318, %p319
    %p321 = scmp.ne.s32.totalorder %s313, %s316
    %p322 = scmp.eq.s32.totalorder %s20, 0
    %p323 = por %p321, %p322
    %p324 = scmp.ne.s32.totalorder %s313, %s316
    %p325 = scmp.eq.s32.totalorder %s25, 1
    %p326 = por %p324, %p325
    %p327 = scmp.ne.s32.totalorder %s316, %s317
    %p328 = scmp.eq.s32.totalorder %s25, 0
    %p329 = por %p327, %p328
    %p330 = scmp.ne.s32.totalorder %s316, %s317
    %p331 = scmp.eq.s32.totalorder %s26, 1
    %p332 = por %p330, %p331
    %p334 = scmp.ne.s32.totalorder %s317, %s333
    %p335 = scmp.eq.s32.totalorder %s26, 0
    %p336 = por %p334, %p335
    %p337 = scmp.le.s32.totalorder 1, %s20
    %p338 = scmp.lt.s32.totalorder %s20, 3
    %p339 = pnand %p337, %p338
    %p340 = pneg %p339
    // Predicated region
    $region9: #{coupling_forward.1} parent=5 // pred_check
      _
    $region10: #{coupling_forward.1} parent=5 // pred_check_branch
      %342 = sbr.rel (%p339) target = $region12
    $region11: #{coupling_forward.1} parent=5 // pred_region
      %s343 = ssub.s32 %s20, 1
      // Predicated region
      $region13: #{coupling_forward.1} parent=11 // pred_check
        %p344 = pneg %p67
      $region14: #{coupling_forward.1} parent=11 // pred_check_branch
        %346 = sbr.rel (%p344) target = $region16
      $region15: #{coupling_forward.1} parent=11 // pred_region
        _
      $region16: #{coupling_forward.1} parent=11 // pred_fallthru
        _
      // Predicated region
      $region17: #{coupling_forward.1} parent=11 // pred_check
        %p347 = pneg %p88
      $region18: #{coupling_forward.1} parent=11 // pred_check_branch
        %349 = sbr.rel (%p347) target = $region20
      $region19: #{coupling_forward.1} parent=11 // pred_region
        _
      $region20: #{coupling_forward.1} parent=11 // pred_fallthru
        _
      // Predicated region
      $region21: #{coupling_forward.1} parent=11 // pred_check
        %p350 = pneg %p109
      $region22: #{coupling_forward.1} parent=11 // pred_check_branch
        %352 = sbr.rel (%p350) target = $region24
      $region23: #{coupling_forward.1} parent=11 // pred_region
        _
      $region24: #{coupling_forward.1} parent=11 // pred_fallthru
        _
      // Predicated region
      $region25: #{coupling_forward.1} parent=11 // pred_check
        %p353 = pneg %p130
      $region26: #{coupling_forward.1} parent=11 // pred_check_branch
        %355 = sbr.rel (%p353) target = $region28
      $region27: #{coupling_forward.1} parent=11 // pred_region
        _
      $region28: #{coupling_forward.1} parent=11 // pred_fallthru
        _
      // Predicated region
      $region29: #{coupling_forward.1} parent=11 // pred_check
        %p356 = pneg %p151
      $region30: #{coupling_forward.1} parent=11 // pred_check_branch
        %358 = sbr.rel (%p356) target = $region32
      $region31: #{coupling_forward.1} parent=11 // pred_region
        _
      $region32: #{coupling_forward.1} parent=11 // pred_fallthru
        _
      // Predicated region
      $region33: #{coupling_forward.1} parent=11 // pred_check
        %p359 = pneg %p172
      $region34: #{coupling_forward.1} parent=11 // pred_check_branch
        %361 = sbr.rel (%p359) target = $region36
      $region35: #{coupling_forward.1} parent=11 // pred_region
        _
      $region36: #{coupling_forward.1} parent=11 // pred_fallthru
        _
      // Predicated region
      $region37: #{coupling_forward.1} parent=11 // pred_check
        %p362 = pneg %p193
      $region38: #{coupling_forward.1} parent=11 // pred_check_branch
        %364 = sbr.rel (%p362) target = $region40
      $region39: #{coupling_forward.1} parent=11 // pred_region
        _
      $region40: #{coupling_forward.1} parent=11 // pred_fallthru
        _
      // Predicated region
      $region41: #{coupling_forward.1} parent=11 // pred_check
        %p365 = pneg %p214
      $region42: #{coupling_forward.1} parent=11 // pred_check_branch
        %367 = sbr.rel (%p365) target = $region44
      $region43: #{coupling_forward.1} parent=11 // pred_region
        _
      $region44: #{coupling_forward.1} parent=11 // pred_fallthru
        _
      // Predicated region
      $region45: #{coupling_forward.1} parent=11 // pred_check
        %p368 = pneg %p235
      $region46: #{coupling_forward.1} parent=11 // pred_check_branch
        %370 = sbr.rel (%p368) target = $region48
      $region47: #{coupling_forward.1} parent=11 // pred_region
        _
      $region48: #{coupling_forward.1} parent=11 // pred_fallthru
        _
      // Predicated region
      $region49: #{coupling_forward.1} parent=11 // pred_check
        %p371 = pneg %p256
      $region50: #{coupling_forward.1} parent=11 // pred_check_branch
        %373 = sbr.rel (%p371) target = $region52
      $region51: #{coupling_forward.1} parent=11 // pred_region
        _
      $region52: #{coupling_forward.1} parent=11 // pred_fallthru
        _
      // Predicated region
      $region53: #{coupling_forward.1} parent=11 // pred_check
        %p374 = pneg %p277
      $region54: #{coupling_forward.1} parent=11 // pred_check_branch
        %376 = sbr.rel (%p374) target = $region56
      $region55: #{coupling_forward.1} parent=11 // pred_region
        _
      $region56: #{coupling_forward.1} parent=11 // pred_fallthru
        _
    $region12: #{coupling_forward.1} parent=5 // pred_fallthru
      _
    %p377 = scmp.lt.s32.totalorder %s20, 2
    // Predicated region
    $region57: #{coupling_forward.1} parent=5 // pred_check
      %p378 = pneg %p377
    $region58: #{coupling_forward.1} parent=5 // pred_check_branch
      %380 = sbr.rel (%p378) target = $region60
    $region59: #{coupling_forward.1} parent=5 // pred_region
      // Predicated region
      $region61: #{coupling_forward.1} parent=59 // pred_check
        %p381 = pneg %p40
      $region62: #{coupling_forward.1} parent=59 // pred_check_branch
        %383 = sbr.rel (%p381) target = $region64
      $region63: #{coupling_forward.1} parent=59 // pred_region
        %p384 = scmp.lt.s32.totalorder %s20, 1
        %s385 = scalar_select %p384, %s20, 1
        %s386 = smul.addr %s385, 2
        %s387 = smul.addr %s386, 8
        %s388 = scalar_lea.vmem %s0, %s387
      $region64: #{coupling_forward.1} parent=59 // pred_fallthru
        _
    $region60: #{coupling_forward.1} parent=5 // pred_fallthru
      _
    %p389 = scmp.le.s32.totalorder 1, %s20
    %p390 = scmp.lt.s32.totalorder %s20, 3
    %p391 = pnand %p389, %p390
    %p392 = pneg %p391
    // Predicated region
    $region65: #{coupling_forward.1} parent=5 // pred_check
      _
    $region66: #{coupling_forward.1} parent=5 // pred_check_branch
      %394 = sbr.rel (%p391) target = $region68
    $region67: #{coupling_forward.1} parent=5 // pred_region
      %s395 = ssub.s32 %s20, 1
      %p396 = scmp.lt.s32.totalorder %s25, 1
      %s397 = scalar_select %p396, %s25, 1
      %s398 = smul.addr %s397, 2
      %s399 = smul.addr %s398, 8
      %s400 = scalar_lea.vmem %s0, %s399
      %p401 = pneg %p46
      %p402 = pneg %p43
      %p403 = pneg %p67
      %p404 = pneg %p64
      %p405 = pneg %p88
      %p406 = pneg %p85
      %p407 = pneg %p109
      %p408 = pneg %p106
      %p409 = pneg %p130
      %p410 = pneg %p127
      %p411 = pneg %p151
      %p412 = pneg %p148
      %p413 = pneg %p172
      %p414 = pneg %p169
      %p415 = pneg %p193
      %p416 = pneg %p190
      %p417 = pneg %p214
      %p418 = pneg %p211
      %p419 = pneg %p235
      %p420 = pneg %p232
      %p421 = pneg %p256
      %p422 = pneg %p253
      %p423 = pneg %p277
      %p424 = pneg %p274
      %p425 = pneg %p303
      %p426 = pneg %p300
      %p427 = scmp.lt.s32.totalorder %s25, 1
      %s428 = scalar_select %p427, %s25, 1
      %s429 = smul.addr %s428, 2
      %s430 = smul.addr %s429, 8
      %s431 = scalar_lea.vmem %s12, %s430
      %p432 = pneg %p329
      %p433 = pneg %p326
      %p434 = scmp.lt.s32.totalorder %s25, 1
      %s435 = scalar_select %p434, %s25, 1
      %s436 = scalar_lea.vmem %s13, %s435
      %p437 = scmp.lt.s32.totalorder %s25, 1
      %s438 = scalar_select %p437, %s25, 1
      %s439 = smul.addr %s438, 2
      %s440 = smul.addr %s439, 8
      %s441 = scalar_lea.vmem %s0, %s440
      %p442 = scmp.lt.s32.totalorder %s25, 1
      %s443 = scalar_select %p442, %s25, 1
      %s444 = smul.addr %s443, 2
      %s445 = smul.addr %s444, 8
      %s446 = scalar_lea.vmem %s12, %s445
      %p447 = scmp.lt.s32.totalorder %s25, 1
      %s448 = scalar_select %p447, %s25, 1
      %s449 = scalar_lea.vmem %s13, %s448
      %v451 = vld [vmem:[%s441] sm:$0xff]
      %v452 = vld [vmem:[%s441 + $0x8] sm:$0xff]
      %v453 = vld [vmem:[%s2] sm:$0xff]
      %455 = vset.pattern.permute.xlu0 0
      %456 = vperm.xlu0 %455, %v453
      %v457 = vpop.permute.xlu0 %456
      %v459 = vmul.f32 %v451, %v457
      %v460 = vmul.f32 %v452, %v457
      %v461 = vld [vmem:[%s3] sm:$0xff]
      %463 = vset.pattern.permute.xlu0 0
      %464 = vperm.xlu0 %463, %v461
      %v465 = vpop.permute.xlu0 %464
      %v467 = vadd.f32 %v459, %v465
      %v468 = vadd.f32 %v460, %v465
      %v469 = vmax.f32 %v467, 0.0
      %v470 = vmax.f32 %v468, 0.0
      %471 = vrot.lane.b32.xlu0 %v469, 17
      %v472 = vpop.permute.xlu0 %471
      %473 = vrot.lane.b32.xlu0 %v470, 17
      %v474 = vpop.permute.xlu0 %473
      %v475 = vlaneseq
      %v476 = vand.u32 %v475, 127
      %vm477 = vcmp.lt.s32.totalorder %v476, 17
      %v478 = vsel %vm477, %v472, %v474
      %v479 = vsel %vm477, %v474, %v472
      %v480 = vld [vmem:[%s1] ss:$8 sm:$0x3]
      %v482 = vlaneseq
      %v483 = vshrl.u32 %v482, 7
      %v484 = vsub.s32 0, %v483
      %v485 = vrot.slane %v480, %v484
      %v486 = vlaneseq
      %v487 = vshrl.u32 %v486, 7
      %v488 = vsub.s32 1, %v487
      %v489 = vrot.slane %v480, %v488
      %v492 = vmul.f32 %v479, %v485
      %v493 = vmul.f32 %v478, %v489
      %494 = vst [vmem:[#allocation2] sm:$0xff] %v492
      %495 = vst [vmem:[#allocation2 + $0x8] sm:$0xff] %v493
      %496 = vrot.lane.b32.xlu0 %v469, 16
      %v497 = vpop.permute.xlu0 %496
      %498 = vrot.lane.b32.xlu0 %v470, 16
      %v499 = vpop.permute.xlu0 %498
      %vm500 = vcmp.lt.s32.totalorder %v476, 16
      %v501 = vsel %vm500, %v497, %v499
      %v502 = vsel %vm500, %v499, %v497
      %s503 = scalar_lea.vmem %s1, 1
      %v504 = vld [vmem:[%s503] ss:$8 sm:$0x3]
      %v506 = vlaneseq
      %v507 = vshrl.u32 %v506, 7
      %v508 = vsub.s32 0, %v507
      %v509 = vrot.slane %v504, %v508
      %v510 = vlaneseq
      %v511 = vshrl.u32 %v510, 7
      %v512 = vsub.s32 1, %v511
      %v513 = vrot.slane %v504, %v512
      %v516 = vmul.f32 %v502, %v509
      %v517 = vmul.f32 %v501, %v513
      %518 = vst [vmem:[#allocation2 + $0x10] sm:$0xff] %v516
      %519 = vst [vmem:[#allocation2 + $0x18] sm:$0xff] %v517
      %520 = vrot.lane.b32.xlu0 %v469, 15
      %v521 = vpop.permute.xlu0 %520
      %522 = vrot.lane.b32.xlu0 %v470, 15
      %v523 = vpop.permute.xlu0 %522
      %vm524 = vcmp.lt.s32.totalorder %v476, 15
      %v525 = vsel %vm524, %v521, %v523
      %v526 = vsel %vm524, %v523, %v521
      %s527 = scalar_lea.vmem %s1, 2
      %v528 = vld [vmem:[%s527] ss:$8 sm:$0x3]
      %v530 = vlaneseq
      %v531 = vshrl.u32 %v530, 7
      %v532 = vsub.s32 0, %v531
      %v533 = vrot.slane %v528, %v532
      %v534 = vlaneseq
      %v535 = vshrl.u32 %v534, 7
      %v536 = vsub.s32 1, %v535
      %v537 = vrot.slane %v528, %v536
      %v540 = vmul.f32 %v526, %v533
      %v541 = vmul.f32 %v525, %v537
      %542 = vst [vmem:[#allocation2 + $0x20] sm:$0xff] %v540
      %543 = vst [vmem:[#allocation2 + $0x28] sm:$0xff] %v541
      %544 = vrot.lane.b32.xlu0 %v469, 1
      %v545 = vpop.permute.xlu0 %544
      %546 = vrot.lane.b32.xlu0 %v470, 1
      %v547 = vpop.permute.xlu0 %546
      %vm548 = vcmp.lt.s32.totalorder %v476, 1
      %v549 = vsel %vm548, %v545, %v547
      %v550 = vsel %vm548, %v547, %v545
      %s551 = scalar_lea.vmem %s1, 3
      %v552 = vld [vmem:[%s551] ss:$8 sm:$0x3]
      %v554 = vlaneseq
      %v555 = vshrl.u32 %v554, 7
      %v556 = vsub.s32 0, %v555
      %v557 = vrot.slane %v552, %v556
      %v558 = vlaneseq
      %v559 = vshrl.u32 %v558, 7
      %v560 = vsub.s32 1, %v559
      %v561 = vrot.slane %v552, %v560
      %v564 = vmul.f32 %v550, %v557
      %v565 = vmul.f32 %v549, %v561
      %566 = vst [vmem:[#allocation2 + $0x30] sm:$0xff] %v564
      %567 = vst [vmem:[#allocation2 + $0x38] sm:$0xff] %v565
      %568 = vst [vmem:[#allocation2 + $0x40] sm:$0xff] %v469
      %569 = vst [vmem:[#allocation2 + $0x48] sm:$0xff] %v470
      %570 = vrot.lane.b32.xlu0 %v469, 127
      %v571 = vpop.permute.xlu0 %570
      %572 = vrot.lane.b32.xlu0 %v470, 127
      %v573 = vpop.permute.xlu0 %572
      %vm574 = vcmp.lt.s32.totalorder %v476, 127
      %v575 = vsel %vm574, %v571, %v573
      %v576 = vsel %vm574, %v573, %v571
      %s577 = scalar_lea.vmem %s1, 4
      %v578 = vld [vmem:[%s577] ss:$8 sm:$0x3]
      %v580 = vlaneseq
      %v581 = vshrl.u32 %v580, 7
      %v582 = vsub.s32 0, %v581
      %v583 = vrot.slane %v578, %v582
      %v584 = vlaneseq
      %v585 = vshrl.u32 %v584, 7
      %v586 = vsub.s32 1, %v585
      %v587 = vrot.slane %v578, %v586
      %v590 = vmul.f32 %v575, %v583
      %v591 = vmul.f32 %v576, %v587
      %592 = vst [vmem:[#allocation2 + $0x50] sm:$0xff] %v590
      %593 = vst [vmem:[#allocation2 + $0x58] sm:$0xff] %v591
      %594 = vrot.lane.b32.xlu0 %v469, 113
      %v595 = vpop.permute.xlu0 %594
      %596 = vrot.lane.b32.xlu0 %v470, 113
      %v597 = vpop.permute.xlu0 %596
      %vm598 = vcmp.lt.s32.totalorder %v476, 113
      %v599 = vsel %vm598, %v595, %v597
      %v600 = vsel %vm598, %v597, %v595
      %s601 = scalar_lea.vmem %s1, 5
      %v602 = vld [vmem:[%s601] ss:$8 sm:$0x3]
      %v604 = vlaneseq
      %v605 = vshrl.u32 %v604, 7
      %v606 = vsub.s32 0, %v605
      %v607 = vrot.slane %v602, %v606
      %v608 = vlaneseq
      %v609 = vshrl.u32 %v608, 7
      %v610 = vsub.s32 1, %v609
      %v611 = vrot.slane %v602, %v610
      %v614 = vmul.f32 %v599, %v607
      %v615 = vmul.f32 %v600, %v611
      %616 = vst [vmem:[#allocation2 + $0x60] sm:$0xff] %v614
      %617 = vst [vmem:[#allocation2 + $0x68] sm:$0xff] %v615
      %618 = vrot.lane.b32.xlu0 %v469, 112
      %v619 = vpop.permute.xlu0 %618
      %620 = vrot.lane.b32.xlu0 %v470, 112
      %v621 = vpop.permute.xlu0 %620
      %vm622 = vcmp.lt.s32.totalorder %v476, 112
      %v623 = vsel %vm622, %v619, %v621
      %v624 = vsel %vm622, %v621, %v619
      %s625 = scalar_lea.vmem %s1, 6
      %v626 = vld [vmem:[%s625] ss:$8 sm:$0x3]
      %v628 = vlaneseq
      %v629 = vshrl.u32 %v628, 7
      %v630 = vsub.s32 0, %v629
      %v631 = vrot.slane %v626, %v630
      %v632 = vlaneseq
      %v633 = vshrl.u32 %v632, 7
      %v634 = vsub.s32 1, %v633
      %v635 = vrot.slane %v626, %v634
      %v638 = vmul.f32 %v623, %v631
      %v639 = vmul.f32 %v624, %v635
      %640 = vst [vmem:[#allocation2 + $0x70] sm:$0xff] %v638
      %641 = vst [vmem:[#allocation2 + $0x78] sm:$0xff] %v639
      %642 = vrot.lane.b32.xlu0 %v469, 111
      %v643 = vpop.permute.xlu0 %642
      %644 = vrot.lane.b32.xlu0 %v470, 111
      %v645 = vpop.permute.xlu0 %644
      %vm646 = vcmp.lt.s32.totalorder %v476, 111
      %v647 = vsel %vm646, %v643, %v645
      %v648 = vsel %vm646, %v645, %v643
      %s649 = scalar_lea.vmem %s1, 7
      %v650 = vld [vmem:[%s649] ss:$8 sm:$0x3]
      %v652 = vlaneseq
      %v653 = vshrl.u32 %v652, 7
      %v654 = vsub.s32 0, %v653
      %v655 = vrot.slane %v650, %v654
      %v656 = vlaneseq
      %v657 = vshrl.u32 %v656, 7
      %v658 = vsub.s32 1, %v657
      %v659 = vrot.slane %v650, %v658
      %v662 = vmul.f32 %v647, %v655
      %v663 = vmul.f32 %v648, %v659
      %664 = vst [vmem:[#allocation2 + $0x80] sm:$0xff] %v662
      %665 = vst [vmem:[#allocation2 + $0x88] sm:$0xff] %v663
      %v666 = vld [vmem:[%s4] sm:$0xff]
      %v667 = vld [vmem:[%s4 + $0x8] sm:$0xff]
      %v668 = vld [vmem:[%s4 + $0x10] sm:$0xff]
      %v669 = vld [vmem:[%s4 + $0x18] sm:$0xff]
      %v670 = vld [vmem:[#allocation2] sm:$0xff]
      %v671 = vld [vmem:[#allocation2 + $0x8] sm:$0xff]
      %v672 = vld [vmem:[#allocation2 + $0x10] sm:$0xff]
      %v673 = vld [vmem:[#allocation2 + $0x18] sm:$0xff]
      %v674 = vld [vmem:[#allocation2 + $0x20] sm:$0xff]
      %v675 = vld [vmem:[#allocation2 + $0x28] sm:$0xff]
      %v676 = vld [vmem:[#allocation2 + $0x30] sm:$0xff]
      %v677 = vld [vmem:[#allocation2 + $0x38] sm:$0xff]
      %v678 = vld [vmem:[#allocation2 + $0x40] sm:$0xff]
      %v679 = vld [vmem:[#allocation2 + $0x48] sm:$0xff]
      %v680 = vld [vmem:[#allocation2 + $0x50] sm:$0xff]
      %v681 = vld [vmem:[#allocation2 + $0x58] sm:$0xff]
      %v682 = vld [vmem:[#allocation2 + $0x60] sm:$0xff]
      %v683 = vld [vmem:[#allocation2 + $0x68] sm:$0xff]
      %v684 = vld [vmem:[#allocation2 + $0x70] sm:$0xff]
      %v685 = vld [vmem:[#allocation2 + $0x78] sm:$0xff]
      %v686 = vld [vmem:[#allocation2 + $0x80] sm:$0xff]
      %v687 = vld [vmem:[#allocation2 + $0x88] sm:$0xff]
      %v688 = vld [vmem:[%s5] sm:$0xff]
      %v689 = vld [vmem:[%s5 + $0x8] sm:$0xff]
      %v690 = vld [vmem:[%s5 + $0x10] sm:$0xff]
      %v691 = vld [vmem:[%s5 + $0x18] sm:$0xff]
      %693 = vset.pattern.permute.xlu0 0
      %694 = vperm.xlu0 %693, %v688
      %v695 = vpop.permute.xlu0 %694
      %698 = vset.pattern.permute.xlu0 0
      %699 = vperm.xlu0 %698, %v689
      %v700 = vpop.permute.xlu0 %699
      %703 = vset.pattern.permute.xlu0 0
      %704 = vperm.xlu0 %703, %v690
      %v705 = vpop.permute.xlu0 %704
      %708 = vset.pattern.permute.xlu0 0
      %709 = vperm.xlu0 %708, %v691
      %v710 = vpop.permute.xlu0 %709
      %vm712 = vcmask 588800
      %v714 = vsel %vm712, %v666, 0
      %v717 = vsel %vm712, %v667, 0
      %v720 = vsel %vm712, %v668, 0
      %v723 = vsel %vm712, %v669, 0
      %725 = vmatprep.subr.mxu0 %v671
      %726 = vmatpush1.msra.mxu0 %v670
      %727 = vmatprep.subr.mxu0 %v673
      %728 = vmatpush1.msra.mxu0 %v672
      %729 = vmatprep.subr.mxu0 %v675
      %730 = vmatpush1.msra.mxu0 %v674
      %731 = vmatprep.subr.mxu0 %v677
      %732 = vmatpush1.msra.mxu0 %v676
      %733 = vmatprep.subr.mxu0 %v679
      %734 = vmatpush1.msra.mxu0 %v678
      %735 = vmatprep.subr.mxu0 %v681
      %736 = vmatpush1.msra.mxu0 %v680
      %737 = vmatprep.subr.mxu0 %v683
      %738 = vmatpush1.msra.mxu0 %v682
      %739 = vmatprep.subr.mxu0 %v685
      %740 = vmatpush1.msra.mxu0 %v684
      %741 = vmatprep.subr.mxu0 %v687
      %742 = vmatpush1.msra.mxu0 %v686
      %743 = vmatprep.subr.mxu0 0.0
      %744 = vmatpush1.msra.mxu0 0.0
      %745 = vmatprep.subr.mxu0 0.0
      %746 = vmatpush1.msra.mxu0 0.0
      %747 = vmatprep.subr.mxu0 0.0
      %748 = vmatpush1.msra.mxu0 0.0
      %749 = vmatprep.subr.mxu0 0.0
      %750 = vmatpush1.msra.mxu0 0.0
      %751 = vmatprep.subr.mxu0 0.0
      %752 = vmatpush1.msra.mxu0 0.0
      %753 = vmatprep.subr.mxu0 0.0
      %754 = vmatpush1.msra.mxu0 0.0
      %755 = vmatprep.subr.mxu0 0.0
      %756 = vmatpush1.msra.mxu0 0.0
      %757 = vmatprep.subr.mxu0 0.0
      %758 = vmatpush1.msra.mxu0 0.0
      %759 = vmatprep.subr.mxu0 0.0
      %760 = vmatpush1.msra.mxu0 0.0
      %761 = vmatprep.subr.mxu0 0.0
      %762 = vmatpush1.msra.mxu0 0.0
      %763 = vmatprep.subr.mxu0 0.0
      %764 = vmatpush1.msra.mxu0 0.0
      %765 = vmatprep.subr.mxu0 0.0
      %766 = vmatpush1.msra.mxu0 0.0
      %767 = vmatprep.subr.mxu0 0.0
      %768 = vmatpush1.msra.mxu0 0.0
      %769 = vmatprep.subr.mxu0 0.0
      %770 = vmatpush1.msra.mxu0 0.0
      %771 = vmatprep.subr.mxu0 0.0
      %772 = vmatpush1.msra.mxu0 0.0
      %773 = vmatprep.subr.mxu0 0.0
      %774 = vmatpush1.msra.mxu0 0.0
      %775 = vmatprep.subr.mxu0 0.0
      %776 = vmatpush1.msra.mxu0 0.0
      %777 = vmatprep.subr.mxu0 0.0
      %778 = vmatpush1.msra.mxu0 0.0
      %779 = vmatprep.subr.mxu0 0.0
      %780 = vmatpush1.msra.mxu0 0.0
      %781 = vmatprep.subr.mxu0 0.0
      %782 = vmatpush1.msra.mxu0 0.0
      %783 = vmatprep.subr.mxu0 0.0
      %784 = vmatpush1.msra.mxu0 0.0
      %785 = vmatprep.subr.mxu0 0.0
      %786 = vmatpush1.msra.mxu0 0.0
      %787 = vmatprep.subr.mxu0 0.0
      %788 = vmatpush1.msra.mxu0 0.0
      %789 = vmatprep.mubr.f32.mxu0 0.0
      %790 = vmatmul.mubr.f32.gmra.mrb[0].mxu0 %v714
      %v791 = vpop.f32.mrb[0].mxu0
      %v792 = vadd.f32 %v695, %v791
      %v793 = vpop.f32.mrb[0].mxu0
      %v794 = vadd.f32 %v695, %v793
      %795 = vmatprep.mubr.f32.mxu0 0.0
      %796 = vmatmul.mubr.f32.gmra.mrb[0].mxu0 %v717
      %v797 = vpop.f32.mrb[0].mxu0
      %v798 = vadd.f32 %v700, %v797
      %v799 = vpop.f32.mrb[0].mxu0
      %v800 = vadd.f32 %v700, %v799
      %801 = vmatprep.mubr.f32.mxu0 0.0
      %802 = vmatmul.mubr.f32.gmra.mrb[0].mxu0 %v720
      %v803 = vpop.f32.mrb[0].mxu0
      %v804 = vadd.f32 %v705, %v803
      %v805 = vpop.f32.mrb[0].mxu0
      %v806 = vadd.f32 %v705, %v805
      %807 = vmatprep.mubr.f32.mxu0 0.0
      %808 = vmatmul.mubr.f32.gmra.mrb[0].mxu0 %v723
      %v809 = vpop.f32.mrb[0].mxu0
      %v810 = vadd.f32 %v710, %v809
      %v811 = vpop.f32.mrb[0].mxu0
      %v812 = vadd.f32 %v710, %v811
      %813 = vdwg.mxu0
      %v814 = vmax.f32 %v792, 0.0
      %v815 = vmax.f32 %v794, 0.0
      %v816 = vmax.f32 %v798, 0.0
      %v817 = vmax.f32 %v800, 0.0
      %v818 = vmax.f32 %v804, 0.0
      %v819 = vmax.f32 %v806, 0.0
      %v820 = vmax.f32 %v810, 0.0
      %v821 = vmax.f32 %v812, 0.0
      %v822 = vld [vmem:[%s6] sm:$0xf]
      %v823 = vld [vmem:[%s6 + $0x4] sm:$0xf]
      %v824 = vld [vmem:[%s6 + $0x8] sm:$0xf]
      %v825 = vld [vmem:[%s6 + $0xc] sm:$0xf]
      %v826 = vpack.c.bf16 %v816, %v814
      %v827 = vpack.c.bf16 %v817, %v815
      %v828 = vpack.c.bf16 %v820, %v818
      %v829 = vpack.c.bf16 %v821, %v819
      %v830 = vld [vmem:[%s7] sm:$0xff]
      %v831 = vld [vmem:[%s7 + $0x8] sm:$0xff]
      %v832 = vld [vmem:[%s7 + $0x10] sm:$0xff]
      %v833 = vld [vmem:[%s7 + $0x18] sm:$0xff]
      %835 = vset.pattern.permute.xlu0 0
      %836 = vperm.xlu0 %835, %v830
      %v837 = vpop.permute.xlu0 %836
      %840 = vset.pattern.permute.xlu0 0
      %841 = vperm.xlu0 %840, %v831
      %v842 = vpop.permute.xlu0 %841
      %845 = vset.pattern.permute.xlu0 0
      %846 = vperm.xlu0 %845, %v832
      %v847 = vpop.permute.xlu0 %846
      %850 = vset.pattern.permute.xlu0 0
      %851 = vperm.xlu0 %850, %v833
      %v852 = vpop.permute.xlu0 %851
      %v858 = vunpack.c.l.b16 %v822
      %v859 = vunpack.c.l.b16 %v823
      %v860 = vunpack.c.l.b16 %v824
      %v861 = vunpack.c.l.b16 %v825
      %v862 = vpack.c.b16 %v859, %v858
      %v863 = vpack.c.b16 %v861, %v860
      %vm864 = vcmask 261120
      %v866 = vsel %vm864, %v862, 0
      %v869 = vsel %vm864, %v863, 0
      %871 = vmatprep.subr.bf16.mxu0 %v827
      %872 = vmatpush1.bf16.msra.mxu0 %v826
      %873 = vmatprep.subr.bf16.mxu0 %v829
      %874 = vmatpush1.bf16.msra.mxu0 %v828
      %875 = vmatprep.subr.bf16.mxu0 0
      %876 = vmatpush1.bf16.msra.mxu0 0
      %877 = vmatprep.subr.bf16.mxu0 0
      %878 = vmatpush1.bf16.msra.mxu0 0
      %879 = vmatprep.subr.bf16.mxu0 0
      %880 = vmatpush1.bf16.msra.mxu0 0
      %881 = vmatprep.subr.bf16.mxu0 0
      %882 = vmatpush1.bf16.msra.mxu0 0
      %883 = vmatprep.subr.bf16.mxu0 0
      %884 = vmatpush1.bf16.msra.mxu0 0
      %885 = vmatprep.subr.bf16.mxu0 0
      %886 = vmatpush1.bf16.msra.mxu0 0
      %887 = vmatprep.subr.bf16.mxu0 0
      %888 = vmatpush1.bf16.msra.mxu0 0
      %889 = vmatprep.subr.bf16.mxu0 0
      %890 = vmatpush1.bf16.msra.mxu0 0
      %891 = vmatprep.subr.bf16.mxu0 0
      %892 = vmatpush1.bf16.msra.mxu0 0
      %893 = vmatprep.subr.bf16.mxu0 0
      %894 = vmatpush1.bf16.msra.mxu0 0
      %895 = vmatprep.subr.bf16.mxu0 0
      %896 = vmatpush1.bf16.msra.mxu0 0
      %897 = vmatprep.subr.bf16.mxu0 0
      %898 = vmatpush1.bf16.msra.mxu0 0
      %899 = vmatprep.subr.bf16.mxu0 0
      %900 = vmatpush1.bf16.msra.mxu0 0
      %901 = vmatprep.subr.bf16.mxu0 0
      %902 = vmatpush1.bf16.msra.mxu0 0
      %903 = vmatprep.mubr.bf16.mxu0 0
      %904 = vmatmul.mubr.bf16.gmra.mrb[0].mxu0 %v866
      %v905 = vpop.f32.mrb[0].mxu0
      %v906 = vadd.f32 %v837, %v905
      %v907 = vpop.f32.mrb[0].mxu0
      %v908 = vadd.f32 %v837, %v907
      %v909 = vpop.f32.mrb[0].mxu0
      %v910 = vadd.f32 %v842, %v909
      %v911 = vpop.f32.mrb[0].mxu0
      %v912 = vadd.f32 %v842, %v911
      %913 = vmatprep.mubr.bf16.mxu0 0
      %914 = vmatmul.mubr.bf16.gmra.mrb[0].mxu0 %v869
      %v915 = vpop.f32.mrb[0].mxu0
      %v916 = vadd.f32 %v847, %v915
      %v917 = vpop.f32.mrb[0].mxu0
      %v918 = vadd.f32 %v847, %v917
      %v919 = vpop.f32.mrb[0].mxu0
      %v920 = vadd.f32 %v852, %v919
      %v921 = vpop.f32.mrb[0].mxu0
      %v922 = vadd.f32 %v852, %v921
      %923 = vdwg.mxu0
      %v924 = vmax.f32 %v906, 0.0
      %v925 = vmax.f32 %v908, 0.0
      %v926 = vmax.f32 %v910, 0.0
      %v927 = vmax.f32 %v912, 0.0
      %v928 = vmax.f32 %v916, 0.0
      %v929 = vmax.f32 %v918, 0.0
      %v930 = vmax.f32 %v920, 0.0
      %v931 = vmax.f32 %v922, 0.0
      %932 = vrot.lane.b32.xlu0 %v924, 17
      %v933 = vpop.permute.xlu0 %932
      %934 = vrot.lane.b32.xlu0 %v926, 17
      %v935 = vpop.permute.xlu0 %934
      %936 = vrot.lane.b32.xlu0 %v928, 17
      %v937 = vpop.permute.xlu0 %936
      %938 = vrot.lane.b32.xlu0 %v930, 17
      %v939 = vpop.permute.xlu0 %938
      %940 = vrot.lane.b32.xlu0 %v925, 17
      %v941 = vpop.permute.xlu0 %940
      %942 = vrot.lane.b32.xlu0 %v927, 17
      %v943 = vpop.permute.xlu0 %942
      %944 = vrot.lane.b32.xlu0 %v929, 17
      %v945 = vpop.permute.xlu0 %944
      %946 = vrot.lane.b32.xlu0 %v931, 17
      %v947 = vpop.permute.xlu0 %946
      %v948 = vsel %vm477, %v933, %v941
      %v949 = vsel %vm477, %v935, %v943
      %v950 = vsel %vm477, %v937, %v945
      %v951 = vsel %vm477, %v939, %v947
      %v952 = vsel %vm477, %v941, %v933
      %v953 = vsel %vm477, %v943, %v935
      %v954 = vsel %vm477, %v945, %v937
      %v955 = vsel %vm477, %v947, %v939
      %v956 = vld [vmem:[%s1] ss:$8 sm:$0x3]
      %v958 = vlaneseq
      %v959 = vshrl.u32 %v958, 7
      %v960 = vsub.s32 0, %v959
      %v961 = vrot.slane %v956, %v960
      %v962 = vlaneseq
      %v963 = vshrl.u32 %v962, 7
      %v964 = vsub.s32 1, %v963
      %v965 = vrot.slane %v956, %v964
      %v968 = vmul.f32 %v952, %v961
      %v969 = vmul.f32 %v948, %v965
      %v970 = vmul.f32 %v953, %v961
      %v971 = vmul.f32 %v949, %v965
      %v972 = vmul.f32 %v954, %v961
      %v973 = vmul.f32 %v950, %v965
      %v974 = vmul.f32 %v955, %v961
      %v975 = vmul.f32 %v951, %v965
      %v976 = vpack.c.bf16 %v970, %v968
      %v977 = vpack.c.bf16 %v971, %v969
      %v978 = vpack.c.bf16 %v974, %v972
      %v979 = vpack.c.bf16 %v975, %v973
      %980 = vst [vmem:[#allocation3] sm:$0xff] %v976
      %981 = vst [vmem:[#allocation3 + $0x8] sm:$0xff] %v977
      %982 = vst [vmem:[#allocation3 + $0x10] sm:$0xff] %v978
      %983 = vst [vmem:[#allocation3 + $0x18] sm:$0xff] %v979
      %984 = vrot.lane.b32.xlu0 %v924, 16
      %v985 = vpop.permute.xlu0 %984
      %986 = vrot.lane.b32.xlu0 %v926, 16
      %v987 = vpop.permute.xlu0 %986
      %988 = vrot.lane.b32.xlu0 %v928, 16
      %v989 = vpop.permute.xlu0 %988
      %990 = vrot.lane.b32.xlu0 %v930, 16
      %v991 = vpop.permute.xlu0 %990
      %992 = vrot.lane.b32.xlu0 %v925, 16
      %v993 = vpop.permute.xlu0 %992
      %994 = vrot.lane.b32.xlu0 %v927, 16
      %v995 = vpop.permute.xlu0 %994
      %996 = vrot.lane.b32.xlu0 %v929, 16
      %v997 = vpop.permute.xlu0 %996
      %998 = vrot.lane.b32.xlu0 %v931, 16
      %v999 = vpop.permute.xlu0 %998
      %v1000 = vsel %vm500, %v985, %v993
      %v1001 = vsel %vm500, %v987, %v995
      %v1002 = vsel %vm500, %v989, %v997
      %v1003 = vsel %vm500, %v991, %v999
      %v1004 = vsel %vm500, %v993, %v985
      %v1005 = vsel %vm500, %v995, %v987
      %v1006 = vsel %vm500, %v997, %v989
      %v1007 = vsel %vm500, %v999, %v991
      %v1008 = vld [vmem:[%s503] ss:$8 sm:$0x3]
      %v1010 = vlaneseq
      %v1011 = vshrl.u32 %v1010, 7
      %v1012 = vsub.s32 0, %v1011
      %v1013 = vrot.slane %v1008, %v1012
      %v1014 = vlaneseq
      %v1015 = vshrl.u32 %v1014, 7
      %v1016 = vsub.s32 1, %v1015
      %v1017 = vrot.slane %v1008, %v1016
      %v1020 = vmul.f32 %v1004, %v1013
      %v1021 = vmul.f32 %v1000, %v1017
      %v1022 = vmul.f32 %v1005, %v1013
      %v1023 = vmul.f32 %v1001, %v1017
      %v1024 = vmul.f32 %v1006, %v1013
      %v1025 = vmul.f32 %v1002, %v1017
      %v1026 = vmul.f32 %v1007, %v1013
      %v1027 = vmul.f32 %v1003, %v1017
      %v1028 = vpack.c.bf16 %v1022, %v1020
      %v1029 = vpack.c.bf16 %v1023, %v1021
      %v1030 = vpack.c.bf16 %v1026, %v1024
      %v1031 = vpack.c.bf16 %v1027, %v1025
      %1032 = vst [vmem:[#allocation3 + $0x20] sm:$0xff] %v1028
      %1033 = vst [vmem:[#allocation3 + $0x28] sm:$0xff] %v1029
      %1034 = vst [vmem:[#allocation3 + $0x30] sm:$0xff] %v1030
      %1035 = vst [vmem:[#allocation3 + $0x38] sm:$0xff] %v1031
      %1036 = vrot.lane.b32.xlu0 %v924, 15
      %v1037 = vpop.permute.xlu0 %1036
      %1038 = vrot.lane.b32.xlu0 %v926, 15
      %v1039 = vpop.permute.xlu0 %1038
      %1040 = vrot.lane.b32.xlu0 %v928, 15
      %v1041 = vpop.permute.xlu0 %1040
      %1042 = vrot.lane.b32.xlu0 %v930, 15
      %v1043 = vpop.permute.xlu0 %1042
      %1044 = vrot.lane.b32.xlu0 %v925, 15
      %v1045 = vpop.permute.xlu0 %1044
      %1046 = vrot.lane.b32.xlu0 %v927, 15
      %v1047 = vpop.permute.xlu0 %1046
      %1048 = vrot.lane.b32.xlu0 %v929, 15
      %v1049 = vpop.permute.xlu0 %1048
      %1050 = vrot.lane.b32.xlu0 %v931, 15
      %v1051 = vpop.permute.xlu0 %1050
      %v1052 = vsel %vm524, %v1037, %v1045
      %v1053 = vsel %vm524, %v1039, %v1047
      %v1054 = vsel %vm524, %v1041, %v1049
      %v1055 = vsel %vm524, %v1043, %v1051
      %v1056 = vsel %vm524, %v1045, %v1037
      %v1057 = vsel %vm524, %v1047, %v1039
      %v1058 = vsel %vm524, %v1049, %v1041
      %v1059 = vsel %vm524, %v1051, %v1043
      %v1060 = vld [vmem:[%s527] ss:$8 sm:$0x3]
      %v1062 = vlaneseq
      %v1063 = vshrl.u32 %v1062, 7
      %v1064 = vsub.s32 0, %v1063
      %v1065 = vrot.slane %v1060, %v1064
      %v1066 = vlaneseq
      %v1067 = vshrl.u32 %v1066, 7
      %v1068 = vsub.s32 1, %v1067
      %v1069 = vrot.slane %v1060, %v1068
      %v1072 = vmul.f32 %v1056, %v1065
      %v1073 = vmul.f32 %v1052, %v1069
      %v1074 = vmul.f32 %v1057, %v1065
      %v1075 = vmul.f32 %v1053, %v1069
      %v1076 = vmul.f32 %v1058, %v1065
      %v1077 = vmul.f32 %v1054, %v1069
      %v1078 = vmul.f32 %v1059, %v1065
      %v1079 = vmul.f32 %v1055, %v1069
      %v1080 = vpack.c.bf16 %v1074, %v1072
      %v1081 = vpack.c.bf16 %v1075, %v1073
      %v1082 = vpack.c.bf16 %v1078, %v1076
      %v1083 = vpack.c.bf16 %v1079, %v1077
      %1084 = vst [vmem:[#allocation3 + $0x40] sm:$0xff] %v1080
      %1085 = vst [vmem:[#allocation3 + $0x48] sm:$0xff] %v1081
      %1086 = vst [vmem:[#allocation3 + $0x50] sm:$0xff] %v1082
      %1087 = vst [vmem:[#allocation3 + $0x58] sm:$0xff] %v1083
      %1088 = vrot.lane.b32.xlu0 %v924, 1
      %v1089 = vpop.permute.xlu0 %1088
      %1090 = vrot.lane.b32.xlu0 %v926, 1
      %v1091 = vpop.permute.xlu0 %1090
      %1092 = vrot.lane.b32.xlu0 %v928, 1
      %v1093 = vpop.permute.xlu0 %1092
      %1094 = vrot.lane.b32.xlu0 %v930, 1
      %v1095 = vpop.permute.xlu0 %1094
      %1096 = vrot.lane.b32.xlu0 %v925, 1
      %v1097 = vpop.permute.xlu0 %1096
      %1098 = vrot.lane.b32.xlu0 %v927, 1
      %v1099 = vpop.permute.xlu0 %1098
      %1100 = vrot.lane.b32.xlu0 %v929, 1
      %v1101 = vpop.permute.xlu0 %1100
      %1102 = vrot.lane.b32.xlu0 %v931, 1
      %v1103 = vpop.permute.xlu0 %1102
      %v1104 = vsel %vm548, %v1089, %v1097
      %v1105 = vsel %vm548, %v1091, %v1099
      %v1106 = vsel %vm548, %v1093, %v1101
      %v1107 = vsel %vm548, %v1095, %v1103
      %v1108 = vsel %vm548, %v1097, %v1089
      %v1109 = vsel %vm548, %v1099, %v1091
      %v1110 = vsel %vm548, %v1101, %v1093
      %v1111 = vsel %vm548, %v1103, %v1095
      %v1112 = vld [vmem:[%s551] ss:$8 sm:$0x3]
      %v1114 = vlaneseq
      %v1115 = vshrl.u32 %v1114, 7
      %v1116 = vsub.s32 0, %v1115
      %v1117 = vrot.slane %v1112, %v1116
      %v1118 = vlaneseq
      %v1119 = vshrl.u32 %v1118, 7
      %v1120 = vsub.s32 1, %v1119
      %v1121 = vrot.slane %v1112, %v1120
      %v1124 = vmul.f32 %v1108, %v1117
      %v1125 = vmul.f32 %v1104, %v1121
      %v1126 = vmul.f32 %v1109, %v1117
      %v1127 = vmul.f32 %v1105, %v1121
      %v1128 = vmul.f32 %v1110, %v1117
      %v1129 = vmul.f32 %v1106, %v1121
      %v1130 = vmul.f32 %v1111, %v1117
      %v1131 = vmul.f32 %v1107, %v1121
      %v1132 = vpack.c.bf16 %v1126, %v1124
      %v1133 = vpack.c.bf16 %v1127, %v1125
      %v1134 = vpack.c.bf16 %v1130, %v1128
      %v1135 = vpack.c.bf16 %v1131, %v1129
      %1136 = vst [vmem:[#allocation3 + $0x60] sm:$0xff] %v1132
      %1137 = vst [vmem:[#allocation3 + $0x68] sm:$0xff] %v1133
      %1138 = vst [vmem:[#allocation3 + $0x70] sm:$0xff] %v1134
      %1139 = vst [vmem:[#allocation3 + $0x78] sm:$0xff] %v1135
      %v1140 = vpack.c.bf16 %v926, %v924
      %v1141 = vpack.c.bf16 %v927, %v925
      %v1142 = vpack.c.bf16 %v930, %v928
      %v1143 = vpack.c.bf16 %v931, %v929
      %1144 = vst [vmem:[#allocation3 + $0x80] sm:$0xff] %v1140
      %1145 = vst [vmem:[#allocation3 + $0x88] sm:$0xff] %v1141
      %1146 = vst [vmem:[#allocation3 + $0x90] sm:$0xff] %v1142
      %1147 = vst [vmem:[#allocation3 + $0x98] sm:$0xff] %v1143
      %1148 = vrot.lane.b32.xlu0 %v924, 127
      %v1149 = vpop.permute.xlu0 %1148
      %1150 = vrot.lane.b32.xlu0 %v926, 127
      %v1151 = vpop.permute.xlu0 %1150
      %1152 = vrot.lane.b32.xlu0 %v928, 127
      %v1153 = vpop.permute.xlu0 %1152
      %1154 = vrot.lane.b32.xlu0 %v930, 127
      %v1155 = vpop.permute.xlu0 %1154
      %1156 = vrot.lane.b32.xlu0 %v925, 127
      %v1157 = vpop.permute.xlu0 %1156
      %1158 = vrot.lane.b32.xlu0 %v927, 127
      %v1159 = vpop.permute.xlu0 %1158
      %1160 = vrot.lane.b32.xlu0 %v929, 127
      %v1161 = vpop.permute.xlu0 %1160
      %1162 = vrot.lane.b32.xlu0 %v931, 127
      %v1163 = vpop.permute.xlu0 %1162
      %v1164 = vsel %vm574, %v1149, %v1157
      %v1165 = vsel %vm574, %v1151, %v1159
      %v1166 = vsel %vm574, %v1153, %v1161
      %v1167 = vsel %vm574, %v1155, %v1163
      %v1168 = vsel %vm574, %v1157, %v1149
      %v1169 = vsel %vm574, %v1159, %v1151
      %v1170 = vsel %vm574, %v1161, %v1153
      %v1171 = vsel %vm574, %v1163, %v1155
      %v1172 = vld [vmem:[%s577] ss:$8 sm:$0x3]
      %v1174 = vlaneseq
      %v1175 = vshrl.u32 %v1174, 7
      %v1176 = vsub.s32 0, %v1175
      %v1177 = vrot.slane %v1172, %v1176
      %v1178 = vlaneseq
      %v1179 = vshrl.u32 %v1178, 7
      %v1180 = vsub.s32 1, %v1179
      %v1181 = vrot.slane %v1172, %v1180
      %v1184 = vmul.f32 %v1164, %v1177
      %v1185 = vmul.f32 %v1168, %v1181
      %v1186 = vmul.f32 %v1165, %v1177
      %v1187 = vmul.f32 %v1169, %v1181
      %v1188 = vmul.f32 %v1166, %v1177
      %v1189 = vmul.f32 %v1170, %v1181
      %v1190 = vmul.f32 %v1167, %v1177
      %v1191 = vmul.f32 %v1171, %v1181
      %v1192 = vpack.c.bf16 %v1186, %v1184
      %v1193 = vpack.c.bf16 %v1187, %v1185
      %v1194 = vpack.c.bf16 %v1190, %v1188
      %v1195 = vpack.c.bf16 %v1191, %v1189
      %1196 = vst [vmem:[#allocation3 + $0xa0] sm:$0xff] %v1192
      %1197 = vst [vmem:[#allocation3 + $0xa8] sm:$0xff] %v1193
      %1198 = vst [vmem:[#allocation3 + $0xb0] sm:$0xff] %v1194
      %1199 = vst [vmem:[#allocation3 + $0xb8] sm:$0xff] %v1195
      %1200 = vrot.lane.b32.xlu0 %v924, 113
      %v1201 = vpop.permute.xlu0 %1200
      %1202 = vrot.lane.b32.xlu0 %v926, 113
      %v1203 = vpop.permute.xlu0 %1202
      %1204 = vrot.lane.b32.xlu0 %v928, 113
      %v1205 = vpop.permute.xlu0 %1204
      %1206 = vrot.lane.b32.xlu0 %v930, 113
      %v1207 = vpop.permute.xlu0 %1206
      %1208 = vrot.lane.b32.xlu0 %v925, 113
      %v1209 = vpop.permute.xlu0 %1208
      %1210 = vrot.lane.b32.xlu0 %v927, 113
      %v1211 = vpop.permute.xlu0 %1210
      %1212 = vrot.lane.b32.xlu0 %v929, 113
      %v1213 = vpop.permute.xlu0 %1212
      %1214 = vrot.lane.b32.xlu0 %v931, 113
      %v1215 = vpop.permute.xlu0 %1214
      %v1216 = vsel %vm598, %v1201, %v1209
      %v1217 = vsel %vm598, %v1203, %v1211
      %v1218 = vsel %vm598, %v1205, %v1213
      %v1219 = vsel %vm598, %v1207, %v1215
      %v1220 = vsel %vm598, %v1209, %v1201
      %v1221 = vsel %vm598, %v1211, %v1203
      %v1222 = vsel %vm598, %v1213, %v1205
      %v1223 = vsel %vm598, %v1215, %v1207
      %v1224 = vld [vmem:[%s601] ss:$8 sm:$0x3]
      %v1226 = vlaneseq
      %v1227 = vshrl.u32 %v1226, 7
      %v1228 = vsub.s32 0, %v1227
      %v1229 = vrot.slane %v1224, %v1228
      %v1230 = vlaneseq
      %v1231 = vshrl.u32 %v1230, 7
      %v1232 = vsub.s32 1, %v1231
      %v1233 = vrot.slane %v1224, %v1232
      %v1236 = vmul.f32 %v1216, %v1229
      %v1237 = vmul.f32 %v1220, %v1233
      %v1238 = vmul.f32 %v1217, %v1229
      %v1239 = vmul.f32 %v1221, %v1233
      %v1240 = vmul.f32 %v1218, %v1229
      %v1241 = vmul.f32 %v1222, %v1233
      %v1242 = vmul.f32 %v1219, %v1229
      %v1243 = vmul.f32 %v1223, %v1233
      %v1244 = vpack.c.bf16 %v1238, %v1236
      %v1245 = vpack.c.bf16 %v1239, %v1237
      %v1246 = vpack.c.bf16 %v1242, %v1240
      %v1247 = vpack.c.bf16 %v1243, %v1241
      %1248 = vst [vmem:[#allocation3 + $0xc0] sm:$0xff] %v1244
      %1249 = vst [vmem:[#allocation3 + $0xc8] sm:$0xff] %v1245
      %1250 = vst [vmem:[#allocation3 + $0xd0] sm:$0xff] %v1246
      %1251 = vst [vmem:[#allocation3 + $0xd8] sm:$0xff] %v1247
      %1252 = vrot.lane.b32.xlu0 %v924, 112
      %v1253 = vpop.permute.xlu0 %1252
      %1254 = vrot.lane.b32.xlu0 %v926, 112
      %v1255 = vpop.permute.xlu0 %1254
      %1256 = vrot.lane.b32.xlu0 %v928, 112
      %v1257 = vpop.permute.xlu0 %1256
      %1258 = vrot.lane.b32.xlu0 %v930, 112
      %v1259 = vpop.permute.xlu0 %1258
      %1260 = vrot.lane.b32.xlu0 %v925, 112
      %v1261 = vpop.permute.xlu0 %1260
      %1262 = vrot.lane.b32.xlu0 %v927, 112
      %v1263 = vpop.permute.xlu0 %1262
      %1264 = vrot.lane.b32.xlu0 %v929, 112
      %v1265 = vpop.permute.xlu0 %1264
      %1266 = vrot.lane.b32.xlu0 %v931, 112
      %v1267 = vpop.permute.xlu0 %1266
      %v1268 = vsel %vm622, %v1253, %v1261
      %v1269 = vsel %vm622, %v1255, %v1263
      %v1270 = vsel %vm622, %v1257, %v1265
      %v1271 = vsel %vm622, %v1259, %v1267
      %v1272 = vsel %vm622, %v1261, %v1253
      %v1273 = vsel %vm622, %v1263, %v1255
      %v1274 = vsel %vm622, %v1265, %v1257
      %v1275 = vsel %vm622, %v1267, %v1259
      %v1276 = vld [vmem:[%s625] ss:$8 sm:$0x3]
      %v1278 = vlaneseq
      %v1279 = vshrl.u32 %v1278, 7
      %v1280 = vsub.s32 0, %v1279
      %v1281 = vrot.slane %v1276, %v1280
      %v1282 = vlaneseq
      %v1283 = vshrl.u32 %v1282, 7
      %v1284 = vsub.s32 1, %v1283
      %v1285 = vrot.slane %v1276, %v1284
      %v1288 = vmul.f32 %v1268, %v1281
      %v1289 = vmul.f32 %v1272, %v1285
      %v1290 = vmul.f32 %v1269, %v1281
      %v1291 = vmul.f32 %v1273, %v1285
      %v1292 = vmul.f32 %v1270, %v1281
      %v1293 = vmul.f32 %v1274, %v1285
      %v1294 = vmul.f32 %v1271, %v1281
      %v1295 = vmul.f32 %v1275, %v1285
      %v1296 = vpack.c.bf16 %v1290, %v1288
      %v1297 = vpack.c.bf16 %v1291, %v1289
      %v1298 = vpack.c.bf16 %v1294, %v1292
      %v1299 = vpack.c.bf16 %v1295, %v1293
      %1300 = vst [vmem:[#allocation3 + $0xe0] sm:$0xff] %v1296
      %1301 = vst [vmem:[#allocation3 + $0xe8] sm:$0xff] %v1297
      %1302 = vst [vmem:[#allocation3 + $0xf0] sm:$0xff] %v1298
      %1303 = vst [vmem:[#allocation3 + $0xf8] sm:$0xff] %v1299
      %1304 = vrot.lane.b32.xlu0 %v924, 111
      %v1305 = vpop.permute.xlu0 %1304
      %1306 = vrot.lane.b32.xlu0 %v926, 111
      %v1307 = vpop.permute.xlu0 %1306
      %1308 = vrot.lane.b32.xlu0 %v928, 111
      %v1309 = vpop.permute.xlu0 %1308
      %1310 = vrot.lane.b32.xlu0 %v930, 111
      %v1311 = vpop.permute.xlu0 %1310
      %1312 = vrot.lane.b32.xlu0 %v925, 111
      %v1313 = vpop.permute.xlu0 %1312
      %1314 = vrot.lane.b32.xlu0 %v927, 111
      %v1315 = vpop.permute.xlu0 %1314
      %1316 = vrot.lane.b32.xlu0 %v929, 111
      %v1317 = vpop.permute.xlu0 %1316
      %1318 = vrot.lane.b32.xlu0 %v931, 111
      %v1319 = vpop.permute.xlu0 %1318
      %v1320 = vsel %vm646, %v1305, %v1313
      %v1321 = vsel %vm646, %v1307, %v1315
      %v1322 = vsel %vm646, %v1309, %v1317
      %v1323 = vsel %vm646, %v1311, %v1319
      %v1324 = vsel %vm646, %v1313, %v1305
      %v1325 = vsel %vm646, %v1315, %v1307
      %v1326 = vsel %vm646, %v1317, %v1309
      %v1327 = vsel %vm646, %v1319, %v1311
      %v1328 = vld [vmem:[%s649] ss:$8 sm:$0x3]
      %v1330 = vlaneseq
      %v1331 = vshrl.u32 %v1330, 7
      %v1332 = vsub.s32 0, %v1331
      %v1333 = vrot.slane %v1328, %v1332
      %v1334 = vlaneseq
      %v1335 = vshrl.u32 %v1334, 7
      %v1336 = vsub.s32 1, %v1335
      %v1337 = vrot.slane %v1328, %v1336
      %v1340 = vmul.f32 %v1320, %v1333
      %v1341 = vmul.f32 %v1324, %v1337
      %v1342 = vmul.f32 %v1321, %v1333
      %v1343 = vmul.f32 %v1325, %v1337
      %v1344 = vmul.f32 %v1322, %v1333
      %v1345 = vmul.f32 %v1326, %v1337
      %v1346 = vmul.f32 %v1323, %v1333
      %v1347 = vmul.f32 %v1327, %v1337
      %v1348 = vpack.c.bf16 %v1342, %v1340
      %v1349 = vpack.c.bf16 %v1343, %v1341
      %v1350 = vpack.c.bf16 %v1346, %v1344
      %v1351 = vpack.c.bf16 %v1347, %v1345
      %1352 = vst [vmem:[#allocation3 + $0x100] sm:$0xff] %v1348
      %1353 = vst [vmem:[#allocation3 + $0x108] sm:$0xff] %v1349
      %1354 = vst [vmem:[#allocation3 + $0x110] sm:$0xff] %v1350
      %1355 = vst [vmem:[#allocation3 + $0x118] sm:$0xff] %v1351
      %v1356 = vld [vmem:[%s8] sm:$0xff]
      %v1357 = vld [vmem:[%s8 + $0x8] sm:$0xf]
      %v1358 = vld [vmem:[#allocation3] sm:$0xff]
      %v1359 = vld [vmem:[#allocation3 + $0x8] sm:$0xff]
      %v1360 = vld [vmem:[#allocation3 + $0x10] sm:$0xff]
      %v1361 = vld [vmem:[#allocation3 + $0x18] sm:$0xff]
      %v1362 = vld [vmem:[#allocation3 + $0x20] sm:$0xff]
      %v1363 = vld [vmem:[#allocation3 + $0x28] sm:$0xff]
      %v1364 = vld [vmem:[#allocation3 + $0x30] sm:$0xff]
      %v1365 = vld [vmem:[#allocation3 + $0x38] sm:$0xff]
      %v1366 = vld [vmem:[#allocation3 + $0x40] sm:$0xff]
      %v1367 = vld [vmem:[#allocation3 + $0x48] sm:$0xff]
      %v1368 = vld [vmem:[#allocation3 + $0x50] sm:$0xff]
      %v1369 = vld [vmem:[#allocation3 + $0x58] sm:$0xff]
      %v1370 = vld [vmem:[#allocation3 + $0x60] sm:$0xff]
      %v1371 = vld [vmem:[#allocation3 + $0x68] sm:$0xff]
      %v1372 = vld [vmem:[#allocation3 + $0x70] sm:$0xff]
      %v1373 = vld [vmem:[#allocation3 + $0x78] sm:$0xff]
      %v1374 = vld [vmem:[#allocation3 + $0x80] sm:$0xff]
      %v1375 = vld [vmem:[#allocation3 + $0x88] sm:$0xff]
      %v1376 = vld [vmem:[#allocation3 + $0x90] sm:$0xff]
      %v1377 = vld [vmem:[#allocation3 + $0x98] sm:$0xff]
      %v1378 = vld [vmem:[#allocation3 + $0xa0] sm:$0xff]
      %v1379 = vld [vmem:[#allocation3 + $0xa8] sm:$0xff]
      %v1380 = vld [vmem:[#allocation3 + $0xb0] sm:$0xff]
      %v1381 = vld [vmem:[#allocation3 + $0xb8] sm:$0xff]
      %v1382 = vld [vmem:[#allocation3 + $0xc0] sm:$0xff]
      %v1383 = vld [vmem:[#allocation3 + $0xc8] sm:$0xff]
      %v1384 = vld [vmem:[#allocation3 + $0xd0] sm:$0xff]
      %v1385 = vld [vmem:[#allocation3 + $0xd8] sm:$0xff]
      %v1386 = vld [vmem:[#allocation3 + $0xe0] sm:$0xff]
      %v1387 = vld [vmem:[#allocation3 + $0xe8] sm:$0xff]
      %v1388 = vld [vmem:[#allocation3 + $0xf0] sm:$0xff]
      %v1389 = vld [vmem:[#allocation3 + $0xf8] sm:$0xff]
      %v1390 = vld [vmem:[#allocation3 + $0x100] sm:$0xff]
      %v1391 = vld [vmem:[#allocation3 + $0x108] sm:$0xff]
      %v1392 = vld [vmem:[#allocation3 + $0x110] sm:$0xff]
      %v1393 = vld [vmem:[#allocation3 + $0x118] sm:$0xff]
      %v1394 = vld [vmem:[%s9] sm:$0xff]
      %1396 = vset.pattern.permute.xlu0 0
      %1397 = vperm.xlu0 %1396, %v1394
      %v1398 = vpop.permute.xlu0 %1397
      %v1402 = vunpack.c.l.b16 %v1356
      %v1403 = vunpack.c.h.b16 %v1356
      %v1404 = vunpack.c.l.b16 %v1357
      %v1405 = vpack.c.b16 %v1402, %v1402
      %v1406 = vpack.c.b16 %v1403, %v1403
      %v1407 = vpack.c.b16 %v1404, %v1404
      %v1411 = vsel %vm864, %v1407, 0
      %1413 = vmatprep.subr.bf16.mxu0 %v1359
      %1414 = vmatpush1.bf16.msra.mxu0 %v1358
      %1415 = vmatprep.subr.bf16.mxu0 %v1361
      %1416 = vmatpush1.bf16.msra.mxu0 %v1360
      %1417 = vmatprep.subr.bf16.mxu0 %v1363
      %1418 = vmatpush1.bf16.msra.mxu0 %v1362
      %1419 = vmatprep.subr.bf16.mxu0 %v1365
      %1420 = vmatpush1.bf16.msra.mxu0 %v1364
      %1421 = vmatprep.subr.bf16.mxu0 %v1367
      %1422 = vmatpush1.bf16.msra.mxu0 %v1366
      %1423 = vmatprep.subr.bf16.mxu0 %v1369
      %1424 = vmatpush1.bf16.msra.mxu0 %v1368
      %1425 = vmatprep.subr.bf16.mxu0 %v1371
      %1426 = vmatpush1.bf16.msra.mxu0 %v1370
      %1427 = vmatprep.subr.bf16.mxu0 %v1373
      %1428 = vmatpush1.bf16.msra.mxu0 %v1372
      %1429 = vmatprep.subr.bf16.mxu0 %v1375
      %1430 = vmatpush1.bf16.msra.mxu0 %v1374
      %1431 = vmatprep.subr.bf16.mxu0 %v1377
      %1432 = vmatpush1.bf16.msra.mxu0 %v1376
      %1433 = vmatprep.subr.bf16.mxu0 %v1379
      %1434 = vmatpush1.bf16.msra.mxu0 %v1378
      %1435 = vmatprep.subr.bf16.mxu0 %v1381
      %1436 = vmatpush1.bf16.msra.mxu0 %v1380
      %1437 = vmatprep.subr.bf16.mxu0 %v1383
      %1438 = vmatpush1.bf16.msra.mxu0 %v1382
      %1439 = vmatprep.subr.bf16.mxu0 %v1385
      %1440 = vmatpush1.bf16.msra.mxu0 %v1384
      %1441 = vmatprep.subr.bf16.mxu0 %v1387
      %1442 = vmatpush1.bf16.msra.mxu0 %v1386
      %1443 = vmatprep.subr.bf16.mxu0 %v1389
      %1444 = vmatpush1.bf16.msra.mxu0 %v1388
      %1445 = vmatprep.mubr.bf16.mxu0 %v1406
      %1446 = vmatmul.mubr.bf16.gmra.mrb[0].mxu0 %v1405
      %v1447 = vpop.f32.mrb[0].mxu0
      %v1448 = vadd.f32 %v1398, %v1447
      %v1449 = vpop.f32.mrb[0].mxu0
      %v1450 = vadd.f32 %v1398, %v1449
      %v1451 = vpop.f32.mrb[0].mxu0
      %v1452 = vpop.f32.mrb[0].mxu0
      %1453 = vdwg.mxu0
      %1454 = vmatprep.subr.bf16.mxu0 %v1391
      %1455 = vmatpush1.bf16.msra.mxu0 %v1390
      %1456 = vmatprep.subr.bf16.mxu0 %v1393
      %1457 = vmatpush1.bf16.msra.mxu0 %v1392
      %1458 = vmatprep.subr.bf16.mxu0 0
      %1459 = vmatpush1.bf16.msra.mxu0 0
      %1460 = vmatprep.subr.bf16.mxu0 0
      %1461 = vmatpush1.bf16.msra.mxu0 0
      %1462 = vmatprep.subr.bf16.mxu0 0
      %1463 = vmatpush1.bf16.msra.mxu0 0
      %1464 = vmatprep.subr.bf16.mxu0 0
      %1465 = vmatpush1.bf16.msra.mxu0 0
      %1466 = vmatprep.subr.bf16.mxu0 0
      %1467 = vmatpush1.bf16.msra.mxu0 0
      %1468 = vmatprep.subr.bf16.mxu0 0
      %1469 = vmatpush1.bf16.msra.mxu0 0
      %1470 = vmatprep.subr.bf16.mxu0 0
      %1471 = vmatpush1.bf16.msra.mxu0 0
      %1472 = vmatprep.subr.bf16.mxu0 0
      %1473 = vmatpush1.bf16.msra.mxu0 0
      %1474 = vmatprep.subr.bf16.mxu0 0
      %1475 = vmatpush1.bf16.msra.mxu0 0
      %1476 = vmatprep.subr.bf16.mxu0 0
      %1477 = vmatpush1.bf16.msra.mxu0 0
      %1478 = vmatprep.subr.bf16.mxu0 0
      %1479 = vmatpush1.bf16.msra.mxu0 0
      %1480 = vmatprep.subr.bf16.mxu0 0
      %1481 = vmatpush1.bf16.msra.mxu0 0
      %1482 = vmatprep.subr.bf16.mxu0 0
      %1483 = vmatpush1.bf16.msra.mxu0 0
      %1484 = vmatprep.subr.bf16.mxu0 0
      %1485 = vmatpush1.bf16.msra.mxu0 0
      %1486 = vmatprep.mubr.bf16.mxu0 0
      %1487 = vmatmul.mubr.bf16.gmra.mrb[0].mxu0 %v1411
      %v1488 = vpop.f32.mrb[0].mxu0
      %v1489 = vadd.f32 %v1448, %v1488
      %v1490 = vpop.f32.mrb[0].mxu0
      %v1491 = vadd.f32 %v1450, %v1490
      %v1492 = vpop.f32.mrb[0].mxu0
      %v1493 = vpop.f32.mrb[0].mxu0
      %1494 = vdwg.mxu0
      %v1495 = vld [vmem:[%s10] sm:$0xff]
      %v1496 = vtanh.pop %v1489
      %v1497 = vtanh.pop %v1491
      %1499 = vset.pattern.permute.xlu0 0
      %1500 = vperm.xlu0 %1499, %v1495
      %v1501 = vpop.permute.xlu0 %1500
      %v1503 = vmul.f32 %v1501, %v1496
      %v1504 = vmul.f32 %v1501, %v1497
      %v1505 = vrot.slane %v1489, 4
      %v1506 = vrot.slane %v1491, 4
      %v1507 = vld [vmem:[%s11] sm:$0xff]
      %1509 = vset.pattern.permute.xlu0 0
      %1510 = vperm.xlu0 %1509, %v1507
      %v1511 = vpop.permute.xlu0 %1510
      %v1513 = vmul.f32 %v1505, %v1511
      %v1514 = vmul.f32 %v1506, %v1511
      %v1515 = vadd.f32 %v451, %v1513
      %v1516 = vadd.f32 %v452, %v1514
      %v1517 = vmul.f32 %v1503, 1.442695
      %v1518 = vpow.pop %v1517
      %v1519 = vmul.f32 %v1504, 1.442695
      %v1520 = vpow.pop %v1519
      %v1521 = vmul.f32 %v1515, %v1518
      %v1522 = vmul.f32 %v1516, %v1520
      %1523 = vst [vmem:[%s446] sm:$0xff] %v1521
      %1524 = vst [vmem:[%s446 + $0x8] sm:$0xff] %v1522
      %v1525 = vadd.f32 %v1503, %v1504
      %1526 = vadd.xlane.f32.xlu0 %v1525
      %v1527 = vpop.xlane.xlu0 %1526
      %v1528 = vrot.slane %v1527, 4
      %v1529 = vadd.f32 %v1527, %v1528
      %v1530 = vrot.slane %v1529, 2
      %v1531 = vadd.f32 %v1529, %v1530
      %v1532 = vrot.slane %v1531, 1
      %v1533 = vadd.f32 %v1531, %v1532
      %s1534 = vtos %v1533
      %v1535 = vstv %s1534
      %1536 = vst [vmem:[%s449] sm:$0x1] %v1535
      %p1537 = scmp.lt.s32.totalorder %s25, 1
      %s1538 = scalar_select %p1537, %s25, 1
      %s1539 = smul.addr %s1538, 2
      %s1540 = smul.addr %s1539, 8
      %s1541 = scalar_lea.vmem %s12, %s1540
      %p1542 = scmp.lt.s32.totalorder %s25, 1
      %s1543 = scalar_select %p1542, %s25, 1
      %s1544 = scalar_lea.vmem %s13, %s1543
      // Predicated region
      $region69: #{coupling_forward.1} parent=67 // pred_check
        %p1545 = pneg %p300
      $region70: #{coupling_forward.1} parent=67 // pred_check_branch
        %1547 = sbr.rel (%p1545) target = $region72
      $region71: #{coupling_forward.1} parent=67 // pred_region
        _
      $region72: #{coupling_forward.1} parent=67 // pred_fallthru
        _
      // Predicated region
      $region73: #{coupling_forward.1} parent=67 // pred_check
        %p1548 = pneg %p326
      $region74: #{coupling_forward.1} parent=67 // pred_check_branch
        %1550 = sbr.rel (%p1548) target = $region76
      $region75: #{coupling_forward.1} parent=67 // pred_region
        _
      $region76: #{coupling_forward.1} parent=67 // pred_fallthru
        _
    $region68: #{coupling_forward.1} parent=5 // pred_fallthru
      _
    %p1551 = scmp.le.s32.totalorder 2, %s20
    // Predicated region
    $region77: #{coupling_forward.1} parent=5 // pred_check
      %p1552 = pneg %p1551
    $region78: #{coupling_forward.1} parent=5 // pred_check_branch
      %1554 = sbr.rel (%p1552) target = $region80
    $region79: #{coupling_forward.1} parent=5 // pred_region
      %s1555 = ssub.s32 %s20, 2
      // Predicated region
      $region81: #{coupling_forward.1} parent=79 // pred_check
        %p1556 = pneg %p306
      $region82: #{coupling_forward.1} parent=79 // pred_check_branch
        %1558 = sbr.rel (%p1556) target = $region84
      $region83: #{coupling_forward.1} parent=79 // pred_region
        %p1559 = scmp.lt.s32.totalorder %s26, 1
        %s1560 = scalar_select %p1559, %s26, 1
        %s1561 = smul.addr %s1560, 2
        %s1562 = smul.addr %s1561, 8
        %s1563 = scalar_lea.vmem %s12, %s1562
      $region84: #{coupling_forward.1} parent=79 // pred_fallthru
        _
      // Predicated region
      $region85: #{coupling_forward.1} parent=79 // pred_check
        %p1564 = pneg %p332
      $region86: #{coupling_forward.1} parent=79 // pred_check_branch
        %1566 = sbr.rel (%p1564) target = $region88
      $region87: #{coupling_forward.1} parent=79 // pred_region
        %p1567 = scmp.lt.s32.totalorder %s26, 1
        %s1568 = scalar_select %p1567, %s26, 1
        %s1569 = scalar_lea.vmem %s13, %s1568
      $region88: #{coupling_forward.1} parent=79 // pred_fallthru
        _
    $region80: #{coupling_forward.1} parent=5 // pred_fallthru
      _
  $region6: #{coupling_forward.1} parent=0 // loop_footer
    %s24 = sadd.s32 1, %s20
  $region7: #{coupling_forward.1} parent=0 // loop_footer_branch
    %19 = sbr.rel target = $region3
  $region8: #{coupling_forward.1} parent=0 // loop_exit
    _

</llo_original>
